<compile_context>
chip_gen: v7x
topology: tpu7x:2x2x1
jax: 0.10.0
libtpu: 0.0.40
codegen_flags: <defaults>
</compile_context>

<pallas_src>
import functools

import jax
import jax.numpy as jnp
from jax.experimental import pallas as pl
from jax.experimental.pallas import tpu as pltpu


def _decoder_kernel(x2d_ref, wih_ref, whh_ref, b_ref, wout_ref, bout_ref,
                    h0_ref, c0_ref,
                    y_ref, hn_ref, cn_ref):
    B, T = y_ref.shape          # (batch, seq_len)
    H = hn_ref.shape[1]         # hidden size

    # ---- Phase 1: hoisted input projection for all timesteps (one MXU matmul).
    #   rows [t*B : (t+1)*B] of xp hold timestep t for all batch elements.
    xp = jnp.dot(x2d_ref[...], wih_ref[...],
                 preferred_element_type=jnp.float32) + b_ref[...]      # (T*B, 4H)

    w_hh = whh_ref[...]         # (H, 4H) packed [i|f|g|o] recurrent weights
    w_out = wout_ref[...]       # (1, H)
    b_out = bout_ref[...]       # (1, 1)

    h = h0_ref[...]             # (B, H)
    c = c0_ref[...]             # (B, H)

    ys = []
    # ---- Phase 2: sequential recurrence, fully unrolled (T is small & static).
    for t in range(T):
        # One packed MXU push per step: (B, H) @ (H, 4H).
        gates = xp[t * B:(t + 1) * B, :] + jnp.dot(
            h, w_hh, preferred_element_type=jnp.float32)               # (B, 4H)

        i_g = jax.nn.sigmoid(gates[:, 0 * H:1 * H])
        f_g = jax.nn.sigmoid(gates[:, 1 * H:2 * H])
        g_g = jnp.tanh(gates[:, 2 * H:3 * H])
        o_g = jax.nn.sigmoid(gates[:, 3 * H:4 * H])

        c = f_g * c + i_g * g_g
        h = o_g * jnp.tanh(c)

        # Linear(H -> 1) head as VPU multiply + lane (XLU) reduction; it does not
        # feed the next step so it hides under the recurrence's MXU/EUP chain.
        ys.append(jnp.sum(h * w_out, axis=-1, keepdims=True))          # (B, 1)

    # Single lane-dense store of the whole output slab (B, T); head bias added once.
    y_ref[...] = jnp.concatenate(ys, axis=-1) + b_out
    hn_ref[...] = h
    cn_ref[...] = c


@functools.partial(jax.jit, static_argnames=())
def decoder_forward(x, encoder_hidden_states, params):
    """x: (B, T, I) float32; encoder_hidden_states: (h0, c0) each (1, B, H)."""
    h0, c0 = encoder_hidden_states
    B, T, I = x.shape
    H = params["w_hh"].shape[1]            # w_hh: (4H, H)

    # Time-major, flattened so rows [t*B:(t+1)*B] hold timestep t (layout plumbing
    # fused into the jitted executable, not compute-hoisting).
    x2d = jnp.transpose(x, (1, 0, 2)).reshape(T * B, I).astype(jnp.float32)
    w_ih_t = jnp.transpose(params["w_ih"]).astype(jnp.float32)     # (I, 4H)
    w_hh_t = jnp.transpose(params["w_hh"]).astype(jnp.float32)     # (H, 4H)
    bias = (params["b_ih"] + params["b_hh"]).reshape(1, 4 * H).astype(jnp.float32)
    w_out = params["w_out"].reshape(1, H).astype(jnp.float32)      # (1, H)
    b_out = params["b_out"].reshape(1, 1).astype(jnp.float32)      # (1, 1)
    h0_2d = h0[0].astype(jnp.float32)                              # (B, H)
    c0_2d = c0[0].astype(jnp.float32)                              # (B, H)

    vmem = pl.BlockSpec(memory_space=pltpu.MemorySpace.VMEM)

    y_bt, h_n, c_n = pl.pallas_call(
        _decoder_kernel,
        out_shape=(
            jax.ShapeDtypeStruct((B, T), jnp.float32),   # lane-dense y (no trailing 1)
            jax.ShapeDtypeStruct((B, H), jnp.float32),   # h_n
            jax.ShapeDtypeStruct((B, H), jnp.float32),   # c_n
        ),
        in_specs=[vmem] * 8,
        out_specs=(vmem, vmem, vmem),
    )(x2d, w_ih_t, w_hh_t, bias, w_out, b_out, h0_2d, c0_2d)

    output = y_bt[:, :, None]                             # (B, T, 1), batch_first
    return output, (h_n[None, :, :], c_n[None, :, :])


def _reference_forward(x, h0, c0, params):
    """Pure-JAX LSTM reference (PyTorch semantics) for validation."""
    H = params["w_hh"].shape[1]
    w_ih_t = params["w_ih"].T
    w_hh_t = params["w_hh"].T
    b = params["b_ih"] + params["b_hh"]

    def step(carry, x_t):
        h, c = carry
        gates = x_t @ w_ih_t + h @ w_hh_t + b
        i = jax.nn.sigmoid(gates[:, 0 * H:1 * H])
        f = jax.nn.sigmoid(gates[:, 1 * H:2 * H])
        g = jnp.tanh(gates[:, 2 * H:3 * H])
        o = jax.nn.sigmoid(gates[:, 3 * H:4 * H])
        c_new = f * c + i * g
        h_new = o * jnp.tanh(c_new)
        return (h_new, c_new), h_new

    (h_n, c_n), hs = jax.lax.scan(step, (h0[0], c0[0]), jnp.transpose(x, (1, 0, 2)))
    lstm_out = jnp.transpose(hs, (1, 0, 2))                    # (B, T, H)
    out = lstm_out @ params["w_out"].T + params["b_out"]       # (B, T, 1)
    return out, (h_n[None], c_n[None])


if __name__ == "__main__":
    # Small shapes consistent with the module: Decoder(input_size=4, hidden_size=32)
    B, T, I, H = 2, 8, 4, 32

    key = jax.random.PRNGKey(0)
    ks = jax.random.split(key, 9)
    scale = 1.0 / jnp.sqrt(H)  # PyTorch default LSTM/Linear init range
    params = {
        "w_ih": jax.random.uniform(ks[0], (4 * H, I), jnp.float32, -scale, scale),
        "w_hh": jax.random.uniform(ks[1], (4 * H, H), jnp.float32, -scale, scale),
        "b_ih": jax.random.uniform(ks[2], (4 * H,), jnp.float32, -scale, scale),
        "b_hh": jax.random.uniform(ks[3], (4 * H,), jnp.float32, -scale, scale),
        "w_out": jax.random.uniform(ks[4], (1, H), jnp.float32, -scale, scale),
        "b_out": jax.random.uniform(ks[5], (1,), jnp.float32, -scale, scale),
    }

    x = jax.random.normal(ks[6], (B, T, I), jnp.float32)
    h0 = jax.random.normal(ks[7], (1, B, H), jnp.float32)
    c0 = jax.random.normal(ks[8], (1, B, H), jnp.float32)

    out, (h_n, c_n) = decoder_forward(x, (h0, c0), params)
    out = jax.block_until_ready(out)
    h_n = jax.block_until_ready(h_n)
    c_n = jax.block_until_ready(c_n)

    # Validate against a pure-JAX reference implementation.
    ref_out, (ref_h, ref_c) = _reference_forward(x, h0, c0, params)
    assert out.shape == (B, T, 1) and h_n.shape == (1, B, H) and c_n.shape == (1, B, H)
    assert jnp.allclose(out, ref_out, atol=1e-5, rtol=1e-5)
    assert jnp.allclose(h_n, ref_h, atol=1e-5, rtol=1e-5)
    assert jnp.allclose(c_n, ref_c, atol=1e-5, rtol=1e-5)

    print("KERNEL_OK")
</pallas_src>

<mosaic_0001>
module attributes {stable_mosaic.version = 11 : i64} {
  func.func @_decoder_kernel(%arg0: memref<16x4xf32, #tpu.memory_space<vmem>>, %arg1: memref<4x128xf32, #tpu.memory_space<vmem>>, %arg2: memref<32x128xf32, #tpu.memory_space<vmem>>, %arg3: memref<1x128xf32, #tpu.memory_space<vmem>>, %arg4: memref<1x32xf32, #tpu.memory_space<vmem>>, %arg5: memref<1x1xf32, #tpu.memory_space<vmem>>, %arg6: memref<2x32xf32, #tpu.memory_space<vmem>>, %arg7: memref<2x32xf32, #tpu.memory_space<vmem>>, %arg8: memref<2x8xf32, #tpu.memory_space<vmem>>, %arg9: memref<2x32xf32, #tpu.memory_space<vmem>>, %arg10: memref<2x32xf32, #tpu.memory_space<vmem>>) attributes {dimension_semantics = [], scalar_prefetch = 0 : i64, scratch_operands = 0 : i64, tpu.core_type = #tpu.core_type<tc>} {
    %c0 = arith.constant 0 : index
    %c0_0 = arith.constant 0 : index
    %0 = vector.load %arg0[%c0, %c0_0] : memref<16x4xf32, #tpu.memory_space<vmem>>, vector<16x4xf32>
    %c0_1 = arith.constant 0 : index
    %c0_2 = arith.constant 0 : index
    %1 = vector.load %arg1[%c0_1, %c0_2] : memref<4x128xf32, #tpu.memory_space<vmem>>, vector<4x128xf32>
    %cst = arith.constant dense<0.000000e+00> : vector<16x128xf32>
    %2 = tpu.matmul %0, %1, %cst {dimension_numbers = #tpu.dot_dimension_numbers<[1], [0], [0], [1], [0, 0, 1, 1], [], []>} : vector<16x4xf32>, vector<4x128xf32>, vector<16x128xf32> -> vector<16x128xf32>
    %c0_3 = arith.constant 0 : index
    %c0_4 = arith.constant 0 : index
    %3 = vector.load %arg3[%c0_3, %c0_4] : memref<1x128xf32, #tpu.memory_space<vmem>>, vector<1x128xf32>
    %4 = vector.broadcast %3 : vector<1x128xf32> to vector<16x128xf32>
    %5 = arith.addf %2, %4 : vector<16x128xf32>
    %c0_5 = arith.constant 0 : index
    %c0_6 = arith.constant 0 : index
    %6 = vector.load %arg2[%c0_5, %c0_6] : memref<32x128xf32, #tpu.memory_space<vmem>>, vector<32x128xf32>
    %c0_7 = arith.constant 0 : index
    %c0_8 = arith.constant 0 : index
    %7 = vector.load %arg4[%c0_7, %c0_8] : memref<1x32xf32, #tpu.memory_space<vmem>>, vector<1x32xf32>
    %c0_9 = arith.constant 0 : index
    %c0_10 = arith.constant 0 : index
    %8 = vector.load %arg5[%c0_9, %c0_10] : memref<1x1xf32, #tpu.memory_space<vmem>>, vector<1x1xf32>
    %c0_11 = arith.constant 0 : index
    %c0_12 = arith.constant 0 : index
    %9 = vector.load %arg6[%c0_11, %c0_12] : memref<2x32xf32, #tpu.memory_space<vmem>>, vector<2x32xf32>
    %c0_13 = arith.constant 0 : index
    %c0_14 = arith.constant 0 : index
    %10 = vector.load %arg7[%c0_13, %c0_14] : memref<2x32xf32, #tpu.memory_space<vmem>>, vector<2x32xf32>
    %11 = vector.extract_strided_slice %5 {offsets = [0, 0], sizes = [2, 128], strides = [1, 1]} : vector<16x128xf32> to vector<2x128xf32>
    %cst_15 = arith.constant dense<0.000000e+00> : vector<2x128xf32>
    %12 = tpu.matmul %9, %6, %cst_15 {dimension_numbers = #tpu.dot_dimension_numbers<[1], [0], [0], [1], [0, 0, 1, 1], [], []>} : vector<2x32xf32>, vector<32x128xf32>, vector<2x128xf32> -> vector<2x128xf32>
    %13 = arith.addf %11, %12 : vector<2x128xf32>
    %14 = vector.extract_strided_slice %13 {offsets = [0, 0], sizes = [2, 32], strides = [1, 1]} : vector<2x128xf32> to vector<2x32xf32>
    %15 = arith.negf %14 : vector<2x32xf32>
    %16 = math.exp %15 : vector<2x32xf32>
    %cst_16 = arith.constant 1.000000e+00 : f32
    %17 = vector.broadcast %cst_16 : f32 to vector<2x32xf32>
    %18 = arith.addf %17, %16 : vector<2x32xf32>
    %19 = arith.divf %17, %18 : vector<2x32xf32>
    %20 = vector.extract_strided_slice %13 {offsets = [0, 32], sizes = [2, 32], strides = [1, 1]} : vector<2x128xf32> to vector<2x32xf32>
    %21 = arith.negf %20 : vector<2x32xf32>
    %22 = math.exp %21 : vector<2x32xf32>
    %cst_17 = arith.constant 1.000000e+00 : f32
    %23 = vector.broadcast %cst_17 : f32 to vector<2x32xf32>
    %24 = arith.addf %23, %22 : vector<2x32xf32>
    %25 = arith.divf %23, %24 : vector<2x32xf32>
    %26 = vector.extract_strided_slice %13 {offsets = [0, 64], sizes = [2, 32], strides = [1, 1]} : vector<2x128xf32> to vector<2x32xf32>
    %27 = math.tanh %26 : vector<2x32xf32>
    %28 = vector.extract_strided_slice %13 {offsets = [0, 96], sizes = [2, 32], strides = [1, 1]} : vector<2x128xf32> to vector<2x32xf32>
    %29 = arith.negf %28 : vector<2x32xf32>
    %30 = math.exp %29 : vector<2x32xf32>
    %cst_18 = arith.constant 1.000000e+00 : f32
    %31 = vector.broadcast %cst_18 : f32 to vector<2x32xf32>
    %32 = arith.addf %31, %30 : vector<2x32xf32>
    %33 = arith.divf %31, %32 : vector<2x32xf32>
    %34 = arith.mulf %25, %10 : vector<2x32xf32>
    %35 = arith.mulf %19, %27 : vector<2x32xf32>
    %36 = arith.addf %34, %35 : vector<2x32xf32>
    %37 = math.tanh %36 : vector<2x32xf32>
    %38 = arith.mulf %33, %37 : vector<2x32xf32>
    %39 = vector.broadcast %7 : vector<1x32xf32> to vector<2x32xf32>
    %40 = arith.mulf %38, %39 : vector<2x32xf32>
    %cst_19 = arith.constant dense<0.000000e+00> : vector<2xf32>
    %41 = vector.multi_reduction <add>, %40, %cst_19 [1] : vector<2x32xf32> to vector<2xf32>
    %42 = vector.shape_cast %41 : vector<2xf32> to vector<2x1xf32>
    %43 = vector.extract_strided_slice %5 {offsets = [2, 0], sizes = [2, 128], strides = [1, 1]} : vector<16x128xf32> to vector<2x128xf32>
    %cst_20 = arith.constant dense<0.000000e+00> : vector<2x128xf32>
    %44 = tpu.matmul %38, %6, %cst_20 {dimension_numbers = #tpu.dot_dimension_numbers<[1], [0], [0], [1], [0, 0, 1, 1], [], []>} : vector<2x32xf32>, vector<32x128xf32>, vector<2x128xf32> -> vector<2x128xf32>
    %45 = arith.addf %43, %44 : vector<2x128xf32>
    %46 = vector.extract_strided_slice %45 {offsets = [0, 0], sizes = [2, 32], strides = [1, 1]} : vector<2x128xf32> to vector<2x32xf32>
    %47 = arith.negf %46 : vector<2x32xf32>
    %48 = math.exp %47 : vector<2x32xf32>
    %cst_21 = arith.constant 1.000000e+00 : f32
    %49 = vector.broadcast %cst_21 : f32 to vector<2x32xf32>
    %50 = arith.addf %49, %48 : vector<2x32xf32>
    %51 = arith.divf %49, %50 : vector<2x32xf32>
    %52 = vector.extract_strided_slice %45 {offsets = [0, 32], sizes = [2, 32], strides = [1, 1]} : vector<2x128xf32> to vector<2x32xf32>
    %53 = arith.negf %52 : vector<2x32xf32>
    %54 = math.exp %53 : vector<2x32xf32>
    %cst_22 = arith.constant 1.000000e+00 : f32
    %55 = vector.broadcast %cst_22 : f32 to vector<2x32xf32>
    %56 = arith.addf %55, %54 : vector<2x32xf32>
    %57 = arith.divf %55, %56 : vector<2x32xf32>
    %58 = vector.extract_strided_slice %45 {offsets = [0, 64], sizes = [2, 32], strides = [1, 1]} : vector<2x128xf32> to vector<2x32xf32>
    %59 = math.tanh %58 : vector<2x32xf32>
    %60 = vector.extract_strided_slice %45 {offsets = [0, 96], sizes = [2, 32], strides = [1, 1]} : vector<2x128xf32> to vector<2x32xf32>
    %61 = arith.negf %60 : vector<2x32xf32>
    %62 = math.exp %61 : vector<2x32xf32>
    %cst_23 = arith.constant 1.000000e+00 : f32
    %63 = vector.broadcast %cst_23 : f32 to vector<2x32xf32>
    %64 = arith.addf %63, %62 : vector<2x32xf32>
    %65 = arith.divf %63, %64 : vector<2x32xf32>
    %66 = arith.mulf %57, %36 : vector<2x32xf32>
    %67 = arith.mulf %51, %59 : vector<2x32xf32>
    %68 = arith.addf %66, %67 : vector<2x32xf32>
    %69 = math.tanh %68 : vector<2x32xf32>
    %70 = arith.mulf %65, %69 : vector<2x32xf32>
    %71 = vector.broadcast %7 : vector<1x32xf32> to vector<2x32xf32>
    %72 = arith.mulf %70, %71 : vector<2x32xf32>
    %cst_24 = arith.constant dense<0.000000e+00> : vector<2xf32>
    %73 = vector.multi_reduction <add>, %72, %cst_24 [1] : vector<2x32xf32> to vector<2xf32>
    %74 = vector.shape_cast %73 : vector<2xf32> to vector<2x1xf32>
    %75 = vector.extract_strided_slice %5 {offsets = [4, 0], sizes = [2, 128], strides = [1, 1]} : vector<16x128xf32> to vector<2x128xf32>
    %cst_25 = arith.constant dense<0.000000e+00> : vector<2x128xf32>
    %76 = tpu.matmul %70, %6, %cst_25 {dimension_numbers = #tpu.dot_dimension_numbers<[1], [0], [0], [1], [0, 0, 1, 1], [], []>} : vector<2x32xf32>, vector<32x128xf32>, vector<2x128xf32> -> vector<2x128xf32>
    %77 = arith.addf %75, %76 : vector<2x128xf32>
    %78 = vector.extract_strided_slice %77 {offsets = [0, 0], sizes = [2, 32], strides = [1, 1]} : vector<2x128xf32> to vector<2x32xf32>
    %79 = arith.negf %78 : vector<2x32xf32>
    %80 = math.exp %79 : vector<2x32xf32>
    %cst_26 = arith.constant 1.000000e+00 : f32
    %81 = vector.broadcast %cst_26 : f32 to vector<2x32xf32>
    %82 = arith.addf %81, %80 : vector<2x32xf32>
    %83 = arith.divf %81, %82 : vector<2x32xf32>
    %84 = vector.extract_strided_slice %77 {offsets = [0, 32], sizes = [2, 32], strides = [1, 1]} : vector<2x128xf32> to vector<2x32xf32>
    %85 = arith.negf %84 : vector<2x32xf32>
    %86 = math.exp %85 : vector<2x32xf32>
    %cst_27 = arith.constant 1.000000e+00 : f32
    %87 = vector.broadcast %cst_27 : f32 to vector<2x32xf32>
    %88 = arith.addf %87, %86 : vector<2x32xf32>
    %89 = arith.divf %87, %88 : vector<2x32xf32>
    %90 = vector.extract_strided_slice %77 {offsets = [0, 64], sizes = [2, 32], strides = [1, 1]} : vector<2x128xf32> to vector<2x32xf32>
    %91 = math.tanh %90 : vector<2x32xf32>
    %92 = vector.extract_strided_slice %77 {offsets = [0, 96], sizes = [2, 32], strides = [1, 1]} : vector<2x128xf32> to vector<2x32xf32>
    %93 = arith.negf %92 : vector<2x32xf32>
    %94 = math.exp %93 : vector<2x32xf32>
    %cst_28 = arith.constant 1.000000e+00 : f32
    %95 = vector.broadcast %cst_28 : f32 to vector<2x32xf32>
    %96 = arith.addf %95, %94 : vector<2x32xf32>
    %97 = arith.divf %95, %96 : vector<2x32xf32>
    %98 = arith.mulf %89, %68 : vector<2x32xf32>
    %99 = arith.mulf %83, %91 : vector<2x32xf32>
    %100 = arith.addf %98, %99 : vector<2x32xf32>
    %101 = math.tanh %100 : vector<2x32xf32>
    %102 = arith.mulf %97, %101 : vector<2x32xf32>
    %103 = vector.broadcast %7 : vector<1x32xf32> to vector<2x32xf32>
    %104 = arith.mulf %102, %103 : vector<2x32xf32>
    %cst_29 = arith.constant dense<0.000000e+00> : vector<2xf32>
    %105 = vector.multi_reduction <add>, %104, %cst_29 [1] : vector<2x32xf32> to vector<2xf32>
    %106 = vector.shape_cast %105 : vector<2xf32> to vector<2x1xf32>
    %107 = vector.extract_strided_slice %5 {offsets = [6, 0], sizes = [2, 128], strides = [1, 1]} : vector<16x128xf32> to vector<2x128xf32>
    %cst_30 = arith.constant dense<0.000000e+00> : vector<2x128xf32>
    %108 = tpu.matmul %102, %6, %cst_30 {dimension_numbers = #tpu.dot_dimension_numbers<[1], [0], [0], [1], [0, 0, 1, 1], [], []>} : vector<2x32xf32>, vector<32x128xf32>, vector<2x128xf32> -> vector<2x128xf32>
    %109 = arith.addf %107, %108 : vector<2x128xf32>
    %110 = vector.extract_strided_slice %109 {offsets = [0, 0], sizes = [2, 32], strides = [1, 1]} : vector<2x128xf32> to vector<2x32xf32>
    %111 = arith.negf %110 : vector<2x32xf32>
    %112 = math.exp %111 : vector<2x32xf32>
    %cst_31 = arith.constant 1.000000e+00 : f32
    %113 = vector.broadcast %cst_31 : f32 to vector<2x32xf32>
    %114 = arith.addf %113, %112 : vector<2x32xf32>
    %115 = arith.divf %113, %114 : vector<2x32xf32>
    %116 = vector.extract_strided_slice %109 {offsets = [0, 32], sizes = [2, 32], strides = [1, 1]} : vector<2x128xf32> to vector<2x32xf32>
    %117 = arith.negf %116 : vector<2x32xf32>
    %118 = math.exp %117 : vector<2x32xf32>
    %cst_32 = arith.constant 1.000000e+00 : f32
    %119 = vector.broadcast %cst_32 : f32 to vector<2x32xf32>
    %120 = arith.addf %119, %118 : vector<2x32xf32>
    %121 = arith.divf %119, %120 : vector<2x32xf32>
    %122 = vector.extract_strided_slice %109 {offsets = [0, 64], sizes = [2, 32], strides = [1, 1]} : vector<2x128xf32> to vector<2x32xf32>
    %123 = math.tanh %122 : vector<2x32xf32>
    %124 = vector.extract_strided_slice %109 {offsets = [0, 96], sizes = [2, 32], strides = [1, 1]} : vector<2x128xf32> to vector<2x32xf32>
    %125 = arith.negf %124 : vector<2x32xf32>
    %126 = math.exp %125 : vector<2x32xf32>
    %cst_33 = arith.constant 1.000000e+00 : f32
    %127 = vector.broadcast %cst_33 : f32 to vector<2x32xf32>
    %128 = arith.addf %127, %126 : vector<2x32xf32>
    %129 = arith.divf %127, %128 : vector<2x32xf32>
    %130 = arith.mulf %121, %100 : vector<2x32xf32>
    %131 = arith.mulf %115, %123 : vector<2x32xf32>
    %132 = arith.addf %130, %131 : vector<2x32xf32>
    %133 = math.tanh %132 : vector<2x32xf32>
    %134 = arith.mulf %129, %133 : vector<2x32xf32>
    %135 = vector.broadcast %7 : vector<1x32xf32> to vector<2x32xf32>
    %136 = arith.mulf %134, %135 : vector<2x32xf32>
    %cst_34 = arith.constant dense<0.000000e+00> : vector<2xf32>
    %137 = vector.multi_reduction <add>, %136, %cst_34 [1] : vector<2x32xf32> to vector<2xf32>
    %138 = vector.shape_cast %137 : vector<2xf32> to vector<2x1xf32>
    %139 = vector.extract_strided_slice %5 {offsets = [8, 0], sizes = [2, 128], strides = [1, 1]} : vector<16x128xf32> to vector<2x128xf32>
    %cst_35 = arith.constant dense<0.000000e+00> : vector<2x128xf32>
    %140 = tpu.matmul %134, %6, %cst_35 {dimension_numbers = #tpu.dot_dimension_numbers<[1], [0], [0], [1], [0, 0, 1, 1], [], []>} : vector<2x32xf32>, vector<32x128xf32>, vector<2x128xf32> -> vector<2x128xf32>
    %141 = arith.addf %139, %140 : vector<2x128xf32>
    %142 = vector.extract_strided_slice %141 {offsets = [0, 0], sizes = [2, 32], strides = [1, 1]} : vector<2x128xf32> to vector<2x32xf32>
    %143 = arith.negf %142 : vector<2x32xf32>
    %144 = math.exp %143 : vector<2x32xf32>
    %cst_36 = arith.constant 1.000000e+00 : f32
    %145 = vector.broadcast %cst_36 : f32 to vector<2x32xf32>
    %146 = arith.addf %145, %144 : vector<2x32xf32>
    %147 = arith.divf %145, %146 : vector<2x32xf32>
    %148 = vector.extract_strided_slice %141 {offsets = [0, 32], sizes = [2, 32], strides = [1, 1]} : vector<2x128xf32> to vector<2x32xf32>
    %149 = arith.negf %148 : vector<2x32xf32>
    %150 = math.exp %149 : vector<2x32xf32>
    %cst_37 = arith.constant 1.000000e+00 : f32
    %151 = vector.broadcast %cst_37 : f32 to vector<2x32xf32>
    %152 = arith.addf %151, %150 : vector<2x32xf32>
    %153 = arith.divf %151, %152 : vector<2x32xf32>
    %154 = vector.extract_strided_slice %141 {offsets = [0, 64], sizes = [2, 32], strides = [1, 1]} : vector<2x128xf32> to vector<2x32xf32>
    %155 = math.tanh %154 : vector<2x32xf32>
    %156 = vector.extract_strided_slice %141 {offsets = [0, 96], sizes = [2, 32], strides = [1, 1]} : vector<2x128xf32> to vector<2x32xf32>
    %157 = arith.negf %156 : vector<2x32xf32>
    %158 = math.exp %157 : vector<2x32xf32>
    %cst_38 = arith.constant 1.000000e+00 : f32
    %159 = vector.broadcast %cst_38 : f32 to vector<2x32xf32>
    %160 = arith.addf %159, %158 : vector<2x32xf32>
    %161 = arith.divf %159, %160 : vector<2x32xf32>
    %162 = arith.mulf %153, %132 : vector<2x32xf32>
    %163 = arith.mulf %147, %155 : vector<2x32xf32>
    %164 = arith.addf %162, %163 : vector<2x32xf32>
    %165 = math.tanh %164 : vector<2x32xf32>
    %166 = arith.mulf %161, %165 : vector<2x32xf32>
    %167 = vector.broadcast %7 : vector<1x32xf32> to vector<2x32xf32>
    %168 = arith.mulf %166, %167 : vector<2x32xf32>
    %cst_39 = arith.constant dense<0.000000e+00> : vector<2xf32>
    %169 = vector.multi_reduction <add>, %168, %cst_39 [1] : vector<2x32xf32> to vector<2xf32>
    %170 = vector.shape_cast %169 : vector<2xf32> to vector<2x1xf32>
    %171 = vector.extract_strided_slice %5 {offsets = [10, 0], sizes = [2, 128], strides = [1, 1]} : vector<16x128xf32> to vector<2x128xf32>
    %cst_40 = arith.constant dense<0.000000e+00> : vector<2x128xf32>
    %172 = tpu.matmul %166, %6, %cst_40 {dimension_numbers = #tpu.dot_dimension_numbers<[1], [0], [0], [1], [0, 0, 1, 1], [], []>} : vector<2x32xf32>, vector<32x128xf32>, vector<2x128xf32> -> vector<2x128xf32>
    %173 = arith.addf %171, %172 : vector<2x128xf32>
    %174 = vector.extract_strided_slice %173 {offsets = [0, 0], sizes = [2, 32], strides = [1, 1]} : vector<2x128xf32> to vector<2x32xf32>
    %175 = arith.negf %174 : vector<2x32xf32>
    %176 = math.exp %175 : vector<2x32xf32>
    %cst_41 = arith.constant 1.000000e+00 : f32
    %177 = vector.broadcast %cst_41 : f32 to vector<2x32xf32>
    %178 = arith.addf %177, %176 : vector<2x32xf32>
    %179 = arith.divf %177, %178 : vector<2x32xf32>
    %180 = vector.extract_strided_slice %173 {offsets = [0, 32], sizes = [2, 32], strides = [1, 1]} : vector<2x128xf32> to vector<2x32xf32>
    %181 = arith.negf %180 : vector<2x32xf32>
    %182 = math.exp %181 : vector<2x32xf32>
    %cst_42 = arith.constant 1.000000e+00 : f32
    %183 = vector.broadcast %cst_42 : f32 to vector<2x32xf32>
    %184 = arith.addf %183, %182 : vector<2x32xf32>
    %185 = arith.divf %183, %184 : vector<2x32xf32>
    %186 = vector.extract_strided_slice %173 {offsets = [0, 64], sizes = [2, 32], strides = [1, 1]} : vector<2x128xf32> to vector<2x32xf32>
    %187 = math.tanh %186 : vector<2x32xf32>
    %188 = vector.extract_strided_slice %173 {offsets = [0, 96], sizes = [2, 32], strides = [1, 1]} : vector<2x128xf32> to vector<2x32xf32>
    %189 = arith.negf %188 : vector<2x32xf32>
    %190 = math.exp %189 : vector<2x32xf32>
    %cst_43 = arith.constant 1.000000e+00 : f32
    %191 = vector.broadcast %cst_43 : f32 to vector<2x32xf32>
    %192 = arith.addf %191, %190 : vector<2x32xf32>
    %193 = arith.divf %191, %192 : vector<2x32xf32>
    %194 = arith.mulf %185, %164 : vector<2x32xf32>
    %195 = arith.mulf %179, %187 : vector<2x32xf32>
    %196 = arith.addf %194, %195 : vector<2x32xf32>
    %197 = math.tanh %196 : vector<2x32xf32>
    %198 = arith.mulf %193, %197 : vector<2x32xf32>
    %199 = vector.broadcast %7 : vector<1x32xf32> to vector<2x32xf32>
    %200 = arith.mulf %198, %199 : vector<2x32xf32>
    %cst_44 = arith.constant dense<0.000000e+00> : vector<2xf32>
    %201 = vector.multi_reduction <add>, %200, %cst_44 [1] : vector<2x32xf32> to vector<2xf32>
    %202 = vector.shape_cast %201 : vector<2xf32> to vector<2x1xf32>
    %203 = vector.extract_strided_slice %5 {offsets = [12, 0], sizes = [2, 128], strides = [1, 1]} : vector<16x128xf32> to vector<2x128xf32>
    %cst_45 = arith.constant dense<0.000000e+00> : vector<2x128xf32>
    %204 = tpu.matmul %198, %6, %cst_45 {dimension_numbers = #tpu.dot_dimension_numbers<[1], [0], [0], [1], [0, 0, 1, 1], [], []>} : vector<2x32xf32>, vector<32x128xf32>, vector<2x128xf32> -> vector<2x128xf32>
    %205 = arith.addf %203, %204 : vector<2x128xf32>
    %206 = vector.extract_strided_slice %205 {offsets = [0, 0], sizes = [2, 32], strides = [1, 1]} : vector<2x128xf32> to vector<2x32xf32>
    %207 = arith.negf %206 : vector<2x32xf32>
    %208 = math.exp %207 : vector<2x32xf32>
    %cst_46 = arith.constant 1.000000e+00 : f32
    %209 = vector.broadcast %cst_46 : f32 to vector<2x32xf32>
    %210 = arith.addf %209, %208 : vector<2x32xf32>
    %211 = arith.divf %209, %210 : vector<2x32xf32>
    %212 = vector.extract_strided_slice %205 {offsets = [0, 32], sizes = [2, 32], strides = [1, 1]} : vector<2x128xf32> to vector<2x32xf32>
    %213 = arith.negf %212 : vector<2x32xf32>
    %214 = math.exp %213 : vector<2x32xf32>
    %cst_47 = arith.constant 1.000000e+00 : f32
    %215 = vector.broadcast %cst_47 : f32 to vector<2x32xf32>
    %216 = arith.addf %215, %214 : vector<2x32xf32>
    %217 = arith.divf %215, %216 : vector<2x32xf32>
    %218 = vector.extract_strided_slice %205 {offsets = [0, 64], sizes = [2, 32], strides = [1, 1]} : vector<2x128xf32> to vector<2x32xf32>
    %219 = math.tanh %218 : vector<2x32xf32>
    %220 = vector.extract_strided_slice %205 {offsets = [0, 96], sizes = [2, 32], strides = [1, 1]} : vector<2x128xf32> to vector<2x32xf32>
    %221 = arith.negf %220 : vector<2x32xf32>
    %222 = math.exp %221 : vector<2x32xf32>
    %cst_48 = arith.constant 1.000000e+00 : f32
    %223 = vector.broadcast %cst_48 : f32 to vector<2x32xf32>
    %224 = arith.addf %223, %222 : vector<2x32xf32>
    %225 = arith.divf %223, %224 : vector<2x32xf32>
    %226 = arith.mulf %217, %196 : vector<2x32xf32>
    %227 = arith.mulf %211, %219 : vector<2x32xf32>
    %228 = arith.addf %226, %227 : vector<2x32xf32>
    %229 = math.tanh %228 : vector<2x32xf32>
    %230 = arith.mulf %225, %229 : vector<2x32xf32>
    %231 = vector.broadcast %7 : vector<1x32xf32> to vector<2x32xf32>
    %232 = arith.mulf %230, %231 : vector<2x32xf32>
    %cst_49 = arith.constant dense<0.000000e+00> : vector<2xf32>
    %233 = vector.multi_reduction <add>, %232, %cst_49 [1] : vector<2x32xf32> to vector<2xf32>
    %234 = vector.shape_cast %233 : vector<2xf32> to vector<2x1xf32>
    %235 = vector.extract_strided_slice %5 {offsets = [14, 0], sizes = [2, 128], strides = [1, 1]} : vector<16x128xf32> to vector<2x128xf32>
    %cst_50 = arith.constant dense<0.000000e+00> : vector<2x128xf32>
    %236 = tpu.matmul %230, %6, %cst_50 {dimension_numbers = #tpu.dot_dimension_numbers<[1], [0], [0], [1], [0, 0, 1, 1], [], []>} : vector<2x32xf32>, vector<32x128xf32>, vector<2x128xf32> -> vector<2x128xf32>
    %237 = arith.addf %235, %236 : vector<2x128xf32>
    %238 = vector.extract_strided_slice %237 {offsets = [0, 0], sizes = [2, 32], strides = [1, 1]} : vector<2x128xf32> to vector<2x32xf32>
    %239 = arith.negf %238 : vector<2x32xf32>
    %240 = math.exp %239 : vector<2x32xf32>
    %cst_51 = arith.constant 1.000000e+00 : f32
    %241 = vector.broadcast %cst_51 : f32 to vector<2x32xf32>
    %242 = arith.addf %241, %240 : vector<2x32xf32>
    %243 = arith.divf %241, %242 : vector<2x32xf32>
    %244 = vector.extract_strided_slice %237 {offsets = [0, 32], sizes = [2, 32], strides = [1, 1]} : vector<2x128xf32> to vector<2x32xf32>
    %245 = arith.negf %244 : vector<2x32xf32>
    %246 = math.exp %245 : vector<2x32xf32>
    %cst_52 = arith.constant 1.000000e+00 : f32
    %247 = vector.broadcast %cst_52 : f32 to vector<2x32xf32>
    %248 = arith.addf %247, %246 : vector<2x32xf32>
    %249 = arith.divf %247, %248 : vector<2x32xf32>
    %250 = vector.extract_strided_slice %237 {offsets = [0, 64], sizes = [2, 32], strides = [1, 1]} : vector<2x128xf32> to vector<2x32xf32>
    %251 = math.tanh %250 : vector<2x32xf32>
    %252 = vector.extract_strided_slice %237 {offsets = [0, 96], sizes = [2, 32], strides = [1, 1]} : vector<2x128xf32> to vector<2x32xf32>
    %253 = arith.negf %252 : vector<2x32xf32>
    %254 = math.exp %253 : vector<2x32xf32>
    %cst_53 = arith.constant 1.000000e+00 : f32
    %255 = vector.broadcast %cst_53 : f32 to vector<2x32xf32>
    %256 = arith.addf %255, %254 : vector<2x32xf32>
    %257 = arith.divf %255, %256 : vector<2x32xf32>
    %258 = arith.mulf %249, %228 : vector<2x32xf32>
    %259 = arith.mulf %243, %251 : vector<2x32xf32>
    %260 = arith.addf %258, %259 : vector<2x32xf32>
    %261 = math.tanh %260 : vector<2x32xf32>
    %262 = arith.mulf %257, %261 : vector<2x32xf32>
    %263 = vector.broadcast %7 : vector<1x32xf32> to vector<2x32xf32>
    %264 = arith.mulf %262, %263 : vector<2x32xf32>
    %cst_54 = arith.constant dense<0.000000e+00> : vector<2xf32>
    %265 = vector.multi_reduction <add>, %264, %cst_54 [1] : vector<2x32xf32> to vector<2xf32>
    %266 = vector.shape_cast %265 : vector<2xf32> to vector<2x1xf32>
    %267 = tpu.concatenate %42, %74, %106, %138, %170, %202, %234, %266 in 1 : vector<2x1xf32>, vector<2x1xf32>, vector<2x1xf32>, vector<2x1xf32>, vector<2x1xf32>, vector<2x1xf32>, vector<2x1xf32>, vector<2x1xf32> -> vector<2x8xf32>
    %268 = vector.broadcast %8 : vector<1x1xf32> to vector<2x8xf32>
    %269 = arith.addf %267, %268 : vector<2x8xf32>
    %c0_55 = arith.constant 0 : index
    %c0_56 = arith.constant 0 : index
    %270 = vector.load %arg8[%c0_55, %c0_56] : memref<2x8xf32, #tpu.memory_space<vmem>>, vector<2x8xf32>
    tpu.vector_store %arg8[%c0_55, %c0_56], %269 {strides = array<i32>} : memref<2x8xf32, #tpu.memory_space<vmem>>, vector<2x8xf32>,
    %c0_57 = arith.constant 0 : index
    %c0_58 = arith.constant 0 : index
    %271 = vector.load %arg9[%c0_57, %c0_58] : memref<2x32xf32, #tpu.memory_space<vmem>>, vector<2x32xf32>
    tpu.vector_store %arg9[%c0_57, %c0_58], %262 {strides = array<i32>} : memref<2x32xf32, #tpu.memory_space<vmem>>, vector<2x32xf32>,
    %c0_59 = arith.constant 0 : index
    %c0_60 = arith.constant 0 : index
    %272 = vector.load %arg10[%c0_59, %c0_60] : memref<2x32xf32, #tpu.memory_space<vmem>>, vector<2x32xf32>
    tpu.vector_store %arg10[%c0_59, %c0_60], %260 {strides = array<i32>} : memref<2x32xf32, #tpu.memory_space<vmem>>, vector<2x32xf32>,
    return
  }
}

</mosaic_0001>

<llo_original>
// kernel: decoder_forward.1
$region0: #{decoder_forward.1}
  #allocation0 [shape = 'u32[]', space=smem, size = 0x4, offset = 0x4, fixed_abs, tag = 'smem constant byte address 0x4 - core index']
  #allocation1 [shape = 'u32[144,128]{1,0:T(1,128)}', space=vmem, size = 0x12000, scoped, tag = 'internal scratch']
  #allocation2 [shape = 'f32[1,1]{1,0:T(1,128)S(1)}', space=vmem, size = 0x200, scoped, tag = 'scoped memory for decoder_forward.1']
  %s0 = inlined_call_operand.vmem [shape: f32[16,4], index: 0, kind: input, shape index: {}]
  %s1 = inlined_call_operand.vmem [shape: f32[4,128], index: 1, kind: input, shape index: {}]
  %s2 = inlined_call_operand.vmem [shape: f32[32,128], index: 2, kind: input, shape index: {}]
  %s3 = inlined_call_operand.vmem [shape: f32[1,128], index: 3, kind: input, shape index: {}]
  %s4 = inlined_call_operand.vmem [shape: f32[1,32], index: 4, kind: input, shape index: {}]
  %s5 = inlined_call_operand.<no memory space> [shape: f32[1,1], index: 5, kind: input, shape index: {}]
  %s6 = inlined_call_operand.vmem [shape: f32[2,32], index: 6, kind: input, shape index: {}]
  %s7 = inlined_call_operand.vmem [shape: f32[2,32], index: 7, kind: input, shape index: {}]
  %s8 = inlined_call_operand.hbm [shape: f32[2,8], index: 8, kind: output, shape index: {0}]
  %s9 = inlined_call_operand.hbm [shape: f32[2,32], index: 9, kind: output, shape index: {1}]
  %s10 = inlined_call_operand.hbm [shape: f32[2,32], index: 10, kind: output, shape index: {2}]
  %11 = xla_tuple %s8, %s9, %s10
  %s12 = sld [smem:[#allocation0]]
  $region58: #{decoder_forward.1} parent=0
    _
  %s14 = ssub.s32 1, %s12
  %s15 = scalar_select 0, %s14, %s12
  %v16 = vstv %s5
  %17 = vst [vmem:[#allocation2] sm:$0x1] %v16
  $region1: #{decoder_forward.1} parent=0
    #allocation3 [shape = 'u8[1024]{0}', space=vmem, size = 0x400, scoped, tag = 'output window, operand 0, single buffered']
    #allocation4 [shape = 's32[1]{0}', space=sflag, size = 0x4, scoped, tag = 'scoped memory for decoder_forward.1']
    #allocation5 [shape = 'u8[1024]{0}', space=vmem, size = 0x400, scoped, tag = 'output window, operand 1, single buffered']
    #allocation6 [shape = 's32[1]{0}', space=sflag, size = 0x4, scoped, tag = 'scoped memory for decoder_forward.1']
    #allocation7 [shape = 'u8[1024]{0}', space=vmem, size = 0x400, scoped, tag = 'output window, operand 2, single buffered']
    %18 = vsyncpa [#allocation4], 0
    %19 = vsyncpa [#allocation6], 0
    // Predicated region
    $region2: #{decoder_forward.1} parent=1 // pred_check
      _
    $region3: #{decoder_forward.1} parent=1 // pred_check_branch
      %21 = sbr.rel (0) target = $region5
    $region4: #{decoder_forward.1} parent=1 // pred_region
      _
    $region5: #{decoder_forward.1} parent=1 // pred_fallthru
      _
    // Predicated region
    $region6: #{decoder_forward.1} parent=1 // pred_check
      _
    $region7: #{decoder_forward.1} parent=1 // pred_check_branch
      %23 = sbr.rel (0) target = $region9
    $region8: #{decoder_forward.1} parent=1 // pred_region
      _
    $region9: #{decoder_forward.1} parent=1 // pred_fallthru
      _
    // Predicated region
    $region10: #{decoder_forward.1} parent=1 // pred_check
      _
    $region11: #{decoder_forward.1} parent=1 // pred_check_branch
      %25 = sbr.rel (0) target = $region13
    $region12: #{decoder_forward.1} parent=1 // pred_region
      _
    $region13: #{decoder_forward.1} parent=1 // pred_fallthru
      _
    // Predicated region
    $region14: #{decoder_forward.1} parent=1 // pred_check
      _
    $region15: #{decoder_forward.1} parent=1 // pred_check_branch
      %27 = sbr.rel (0) target = $region17
    $region16: #{decoder_forward.1} parent=1 // pred_region
      _
    $region17: #{decoder_forward.1} parent=1 // pred_fallthru
      _
    // Predicated region
    $region18: #{decoder_forward.1} parent=1 // pred_check
      _
    $region19: #{decoder_forward.1} parent=1 // pred_check_branch
      %29 = sbr.rel (0) target = $region21
    $region20: #{decoder_forward.1} parent=1 // pred_region
      _
    $region21: #{decoder_forward.1} parent=1 // pred_fallthru
      _
    // Predicated region
    $region22: #{decoder_forward.1} parent=1 // pred_check
      _
    $region23: #{decoder_forward.1} parent=1 // pred_check_branch
      %31 = sbr.rel (0) target = $region25
    $region24: #{decoder_forward.1} parent=1 // pred_region
      _
    $region25: #{decoder_forward.1} parent=1 // pred_fallthru
      _
    // Predicated region
    $region26: #{decoder_forward.1} parent=1 // pred_check
      _
    $region27: #{decoder_forward.1} parent=1 // pred_check_branch
      %33 = sbr.rel (0) target = $region29
    $region28: #{decoder_forward.1} parent=1 // pred_region
      _
    $region29: #{decoder_forward.1} parent=1 // pred_fallthru
      _
    // Predicated region
    $region30: #{decoder_forward.1} parent=1 // pred_check
      _
    $region31: #{decoder_forward.1} parent=1 // pred_check_branch
      %35 = sbr.rel (0) target = $region33
    $region32: #{decoder_forward.1} parent=1 // pred_region
      _
    $region33: #{decoder_forward.1} parent=1 // pred_fallthru
      _
    %v36 = vld [vmem:[%s0] sm:$0xff]
    %v37 = vld [vmem:[%s0 + $0x8] sm:$0xff]
    %v38 = vld [vmem:[%s1] sm:$0xf]
    %v39 = vld [vmem:[%s3] sm:$0x1]
    %v41 = vlaneseq
    %v42 = vshrl.u32 %v41, 7
    %v43 = vsub.s32 0, %v42
    %v44 = vrot.slane %v39, %v43
    %vm46 = vcmask 31744
    %v48 = vsel %vm46, %v36, 0
    %v51 = vsel %vm46, %v37, 0
    %vm53 = vcmask 1043456
    %v55 = vsel %vm53, %v38, 0
    %57 = vmatprep.subr.mxu0 0.0
    %58 = vmatpush1.msra.mxu0 %v55
    %59 = vmatprep.subr.mxu0 0.0
    %60 = vmatpush1.msra.mxu0 0.0
    %61 = vmatprep.subr.mxu0 0.0
    %62 = vmatpush1.msra.mxu0 0.0
    %63 = vmatprep.subr.mxu0 0.0
    %64 = vmatpush1.msra.mxu0 0.0
    %65 = vmatprep.subr.mxu0 0.0
    %66 = vmatpush1.msra.mxu0 0.0
    %67 = vmatprep.subr.mxu0 0.0
    %68 = vmatpush1.msra.mxu0 0.0
    %69 = vmatprep.subr.mxu0 0.0
    %70 = vmatpush1.msra.mxu0 0.0
    %71 = vmatprep.subr.mxu0 0.0
    %72 = vmatpush1.msra.mxu0 0.0
    %73 = vmatprep.subr.mxu0 0.0
    %74 = vmatpush1.msra.mxu0 0.0
    %75 = vmatprep.subr.mxu0 0.0
    %76 = vmatpush1.msra.mxu0 0.0
    %77 = vmatprep.subr.mxu0 0.0
    %78 = vmatpush1.msra.mxu0 0.0
    %79 = vmatprep.subr.mxu0 0.0
    %80 = vmatpush1.msra.mxu0 0.0
    %81 = vmatprep.subr.mxu0 0.0
    %82 = vmatpush1.msra.mxu0 0.0
    %83 = vmatprep.subr.mxu0 0.0
    %84 = vmatpush1.msra.mxu0 0.0
    %85 = vmatprep.subr.mxu0 0.0
    %86 = vmatpush1.msra.mxu0 0.0
    %87 = vmatprep.subr.mxu0 0.0
    %88 = vmatpush1.msra.mxu0 0.0
    %89 = vmatprep.subr.mxu0 0.0
    %90 = vmatpush1.msra.mxu0 0.0
    %91 = vmatprep.subr.mxu0 0.0
    %92 = vmatpush1.msra.mxu0 0.0
    %93 = vmatprep.subr.mxu0 0.0
    %94 = vmatpush1.msra.mxu0 0.0
    %95 = vmatprep.subr.mxu0 0.0
    %96 = vmatpush1.msra.mxu0 0.0
    %97 = vmatprep.subr.mxu0 0.0
    %98 = vmatpush1.msra.mxu0 0.0
    %99 = vmatprep.subr.mxu0 0.0
    %100 = vmatpush1.msra.mxu0 0.0
    %101 = vmatprep.subr.mxu0 0.0
    %102 = vmatpush1.msra.mxu0 0.0
    %103 = vmatprep.subr.mxu0 0.0
    %104 = vmatpush1.msra.mxu0 0.0
    %105 = vmatprep.subr.mxu0 0.0
    %106 = vmatpush1.msra.mxu0 0.0
    %107 = vmatprep.subr.mxu0 0.0
    %108 = vmatpush1.msra.mxu0 0.0
    %109 = vmatprep.subr.mxu0 0.0
    %110 = vmatpush1.msra.mxu0 0.0
    %111 = vmatprep.subr.mxu0 0.0
    %112 = vmatpush1.msra.mxu0 0.0
    %113 = vmatprep.subr.mxu0 0.0
    %114 = vmatpush1.msra.mxu0 0.0
    %115 = vmatprep.subr.mxu0 0.0
    %116 = vmatpush1.msra.mxu0 0.0
    %117 = vmatprep.subr.mxu0 0.0
    %118 = vmatpush1.msra.mxu0 0.0
    %119 = vmatprep.subr.mxu0 0.0
    %120 = vmatpush1.msra.mxu0 0.0
    %121 = vmatprep.mubr.f32.mxu0 0.0
    %122 = vmatmul.mubr.f32.gmra.mrb[0].mxu0 %v48
    %v123 = vpop.f32.mrb[0].mxu0
    %v124 = vadd.f32 %v44, %v123
    %v125 = vpop.f32.mrb[0].mxu0
    %126 = vmatprep.mubr.f32.mxu0 0.0
    %127 = vmatmul.mubr.f32.gmra.mrb[0].mxu0 %v51
    %v128 = vpop.f32.mrb[0].mxu0
    %v129 = vadd.f32 %v44, %v128
    %v130 = vpop.f32.mrb[0].mxu0
    %131 = vdwg.mxu0
    %v132 = vld [vmem:[%s2] sm:$0xff]
    %v133 = vld [vmem:[%s2 + $0x8] sm:$0xff]
    %v134 = vld [vmem:[%s2 + $0x10] sm:$0xff]
    %v135 = vld [vmem:[%s2 + $0x18] sm:$0xff]
    %v136 = vld [vmem:[%s4] sm:$0x1]
    %v137 = vld [vmem:[#allocation2] sm:$0x1]
    %v138 = vld [vmem:[%s6] sm:$0x3]
    %v139 = vld [vmem:[%s7] sm:$0x3]
    %vm140 = vcmask 261120
    %v142 = vsel %vm140, %v138, 0
    %144 = vmatprep.subr.mxu0 0.0
    %145 = vmatpush1.msra.mxu0 %v132
    %146 = vmatprep.subr.mxu0 0.0
    %147 = vmatpush1.msra.mxu0 %v133
    %148 = vmatprep.subr.mxu0 0.0
    %149 = vmatpush1.msra.mxu0 %v134
    %150 = vmatprep.subr.mxu0 0.0
    %151 = vmatpush1.msra.mxu0 %v135
    %152 = vmatprep.subr.mxu0 0.0
    %153 = vmatpush1.msra.mxu0 0.0
    %154 = vmatprep.subr.mxu0 0.0
    %155 = vmatpush1.msra.mxu0 0.0
    %156 = vmatprep.subr.mxu0 0.0
    %157 = vmatpush1.msra.mxu0 0.0
    %158 = vmatprep.subr.mxu0 0.0
    %159 = vmatpush1.msra.mxu0 0.0
    %160 = vmatprep.subr.mxu0 0.0
    %161 = vmatpush1.msra.mxu0 0.0
    %162 = vmatprep.subr.mxu0 0.0
    %163 = vmatpush1.msra.mxu0 0.0
    %164 = vmatprep.subr.mxu0 0.0
    %165 = vmatpush1.msra.mxu0 0.0
    %166 = vmatprep.subr.mxu0 0.0
    %167 = vmatpush1.msra.mxu0 0.0
    %168 = vmatprep.subr.mxu0 0.0
    %169 = vmatpush1.msra.mxu0 0.0
    %170 = vmatprep.subr.mxu0 0.0
    %171 = vmatpush1.msra.mxu0 0.0
    %172 = vmatprep.subr.mxu0 0.0
    %173 = vmatpush1.msra.mxu0 0.0
    %174 = vmatprep.subr.mxu0 0.0
    %175 = vmatpush1.msra.mxu0 0.0
    %176 = vmatprep.subr.mxu0 0.0
    %177 = vmatpush1.msra.mxu0 0.0
    %178 = vmatprep.subr.mxu0 0.0
    %179 = vmatpush1.msra.mxu0 0.0
    %180 = vmatprep.subr.mxu0 0.0
    %181 = vmatpush1.msra.mxu0 0.0
    %182 = vmatprep.subr.mxu0 0.0
    %183 = vmatpush1.msra.mxu0 0.0
    %184 = vmatprep.subr.mxu0 0.0
    %185 = vmatpush1.msra.mxu0 0.0
    %186 = vmatprep.subr.mxu0 0.0
    %187 = vmatpush1.msra.mxu0 0.0
    %188 = vmatprep.subr.mxu0 0.0
    %189 = vmatpush1.msra.mxu0 0.0
    %190 = vmatprep.subr.mxu0 0.0
    %191 = vmatpush1.msra.mxu0 0.0
    %192 = vmatprep.subr.mxu0 0.0
    %193 = vmatpush1.msra.mxu0 0.0
    %194 = vmatprep.subr.mxu0 0.0
    %195 = vmatpush1.msra.mxu0 0.0
    %196 = vmatprep.subr.mxu0 0.0
    %197 = vmatpush1.msra.mxu0 0.0
    %198 = vmatprep.subr.mxu0 0.0
    %199 = vmatpush1.msra.mxu0 0.0
    %200 = vmatprep.subr.mxu0 0.0
    %201 = vmatpush1.msra.mxu0 0.0
    %202 = vmatprep.subr.mxu0 0.0
    %203 = vmatpush1.msra.mxu0 0.0
    %204 = vmatprep.subr.mxu0 0.0
    %205 = vmatpush1.msra.mxu0 0.0
    %206 = vmatprep.subr.mxu0 0.0
    %207 = vmatpush1.msra.mxu0 0.0
    %208 = vmatprep.mubr.f32.mxu0 0.0
    %209 = vmatmul.mubr.f32.gmra.mrb[0].mxu0 %v142
    %v210 = vpop.f32.mrb[0].mxu0
    %v211 = vadd.f32 0.0, %v210
    %v212 = vpop.f32.mrb[0].mxu0
    %213 = vdwg.mxu0
    %v214 = vadd.f32 %v124, %v211
    %v215 = vxor.u32 %v214, 2147483648
    %v216 = vmul.f32 %v215, 1.442695
    %v217 = vpow.pop %v216
    %v218 = vadd.f32 %v217, 1.0
    %v219 = vrcp.pop %v218
    %v220 = vmul.f32 1.0, %v219
    %v221 = vtanh.pop %v214
    %223 = vrot.lane.b32.xlu0 %v139, 32
    %v224 = vpop.permute.xlu0 %223
    %v226 = vmul.f32 %v220, %v224
    %228 = vrot.lane.b32.xlu0 %v221, 64
    %v229 = vpop.permute.xlu0 %228
    %v231 = vmul.f32 %v220, %v229
    %233 = vrot.lane.b32.xlu0 %v231, 32
    %v234 = vpop.permute.xlu0 %233
    %v236 = vadd.f32 %v226, %v234
    %v237 = vtanh.pop %v236
    %239 = vrot.lane.b32.xlu0 %v237, 64
    %v240 = vpop.permute.xlu0 %239
    %v242 = vmul.f32 %v220, %v240
    %v244 = vlaneseq
    %v245 = vshrl.u32 %v244, 7
    %v246 = vsub.s32 0, %v245
    %v247 = vrot.slane %v136, %v246
    %248 = vrot.lane.b32.xlu0 %v247, 96
    %v249 = vpop.permute.xlu0 %248
    %v251 = vmul.f32 %v242, %v249
    %253 = vrot.lane.b32.xlu0 %v251, 32
    %v254 = vpop.permute.xlu0 %253
    %vm256 = vcmask 254976
    %v257 = vsel %vm256, %v254, 0.0
    %258 = vadd.xlane.f32.xlu0 %v257
    %v259 = vpop.xlane.xlu0 %258
    %261 = vrot.lane.b32.xlu0 %v242, 32
    %v262 = vpop.permute.xlu0 %261
    %v263 = vsel %vm140, %v262, 0
    %265 = vmatprep.subr.mxu0 0.0
    %266 = vmatpush1.msra.mxu0 %v132
    %267 = vmatprep.subr.mxu0 0.0
    %268 = vmatpush1.msra.mxu0 %v133
    %269 = vmatprep.subr.mxu0 0.0
    %270 = vmatpush1.msra.mxu0 %v134
    %271 = vmatprep.subr.mxu0 0.0
    %272 = vmatpush1.msra.mxu0 %v135
    %273 = vmatprep.subr.mxu0 0.0
    %274 = vmatpush1.msra.mxu0 0.0
    %275 = vmatprep.subr.mxu0 0.0
    %276 = vmatpush1.msra.mxu0 0.0
    %277 = vmatprep.subr.mxu0 0.0
    %278 = vmatpush1.msra.mxu0 0.0
    %279 = vmatprep.subr.mxu0 0.0
    %280 = vmatpush1.msra.mxu0 0.0
    %281 = vmatprep.subr.mxu0 0.0
    %282 = vmatpush1.msra.mxu0 0.0
    %283 = vmatprep.subr.mxu0 0.0
    %284 = vmatpush1.msra.mxu0 0.0
    %285 = vmatprep.subr.mxu0 0.0
    %286 = vmatpush1.msra.mxu0 0.0
    %287 = vmatprep.subr.mxu0 0.0
    %288 = vmatpush1.msra.mxu0 0.0
    %289 = vmatprep.subr.mxu0 0.0
    %290 = vmatpush1.msra.mxu0 0.0
    %291 = vmatprep.subr.mxu0 0.0
    %292 = vmatpush1.msra.mxu0 0.0
    %293 = vmatprep.subr.mxu0 0.0
    %294 = vmatpush1.msra.mxu0 0.0
    %295 = vmatprep.subr.mxu0 0.0
    %296 = vmatpush1.msra.mxu0 0.0
    %297 = vmatprep.subr.mxu0 0.0
    %298 = vmatpush1.msra.mxu0 0.0
    %299 = vmatprep.subr.mxu0 0.0
    %300 = vmatpush1.msra.mxu0 0.0
    %301 = vmatprep.subr.mxu0 0.0
    %302 = vmatpush1.msra.mxu0 0.0
    %303 = vmatprep.subr.mxu0 0.0
    %304 = vmatpush1.msra.mxu0 0.0
    %305 = vmatprep.subr.mxu0 0.0
    %306 = vmatpush1.msra.mxu0 0.0
    %307 = vmatprep.subr.mxu0 0.0
    %308 = vmatpush1.msra.mxu0 0.0
    %309 = vmatprep.subr.mxu0 0.0
    %310 = vmatpush1.msra.mxu0 0.0
    %311 = vmatprep.subr.mxu0 0.0
    %312 = vmatpush1.msra.mxu0 0.0
    %313 = vmatprep.subr.mxu0 0.0
    %314 = vmatpush1.msra.mxu0 0.0
    %315 = vmatprep.subr.mxu0 0.0
    %316 = vmatpush1.msra.mxu0 0.0
    %317 = vmatprep.subr.mxu0 0.0
    %318 = vmatpush1.msra.mxu0 0.0
    %319 = vmatprep.subr.mxu0 0.0
    %320 = vmatpush1.msra.mxu0 0.0
    %321 = vmatprep.subr.mxu0 0.0
    %322 = vmatpush1.msra.mxu0 0.0
    %323 = vmatprep.subr.mxu0 0.0
    %324 = vmatpush1.msra.mxu0 0.0
    %325 = vmatprep.subr.mxu0 0.0
    %326 = vmatpush1.msra.mxu0 0.0
    %327 = vmatprep.subr.mxu0 0.0
    %328 = vmatpush1.msra.mxu0 0.0
    %329 = vmatprep.mubr.f32.mxu0 0.0
    %330 = vmatmul.mubr.f32.gmra.mrb[0].mxu0 %v263
    %v331 = vpop.f32.mrb[0].mxu0
    %v332 = vadd.f32 0.0, %v331
    %v333 = vpop.f32.mrb[0].mxu0
    %334 = vdwg.mxu0
    %v336 = vrot.slane %v332, 6
    %v338 = vadd.f32 %v124, %v336
    %v339 = vxor.u32 %v338, 2147483648
    %v340 = vmul.f32 %v339, 1.442695
    %v341 = vpow.pop %v340
    %v342 = vadd.f32 %v341, 1.0
    %v343 = vrcp.pop %v342
    %v344 = vmul.f32 1.0, %v343
    %v345 = vtanh.pop %v338
    %v347 = vrot.slane %v236, 6
    %v349 = vmul.f32 %v344, %v347
    %351 = vrot.lane.b32.xlu0 %v345, 64
    %v352 = vpop.permute.xlu0 %351
    %v354 = vmul.f32 %v344, %v352
    %356 = vrot.lane.b32.xlu0 %v354, 32
    %v357 = vpop.permute.xlu0 %356
    %v359 = vadd.f32 %v349, %v357
    %v360 = vtanh.pop %v359
    %362 = vrot.lane.b32.xlu0 %v360, 64
    %v363 = vpop.permute.xlu0 %362
    %v365 = vmul.f32 %v344, %v363
    %v366 = vmul.f32 %v365, %v249
    %368 = vrot.lane.b32.xlu0 %v366, 32
    %v369 = vpop.permute.xlu0 %368
    %vm371 = vcmask 257026
    %v372 = vsel %vm371, %v369, 0.0
    %373 = vadd.xlane.f32.xlu0 %v372
    %v374 = vpop.xlane.xlu0 %373
    %v376 = vrot.slane %v365, 2
    %377 = vrot.lane.b32.xlu0 %v376, 32
    %v378 = vpop.permute.xlu0 %377
    %v379 = vsel %vm140, %v378, 0
    %381 = vmatprep.subr.mxu0 0.0
    %382 = vmatpush1.msra.mxu0 %v132
    %383 = vmatprep.subr.mxu0 0.0
    %384 = vmatpush1.msra.mxu0 %v133
    %385 = vmatprep.subr.mxu0 0.0
    %386 = vmatpush1.msra.mxu0 %v134
    %387 = vmatprep.subr.mxu0 0.0
    %388 = vmatpush1.msra.mxu0 %v135
    %389 = vmatprep.subr.mxu0 0.0
    %390 = vmatpush1.msra.mxu0 0.0
    %391 = vmatprep.subr.mxu0 0.0
    %392 = vmatpush1.msra.mxu0 0.0
    %393 = vmatprep.subr.mxu0 0.0
    %394 = vmatpush1.msra.mxu0 0.0
    %395 = vmatprep.subr.mxu0 0.0
    %396 = vmatpush1.msra.mxu0 0.0
    %397 = vmatprep.subr.mxu0 0.0
    %398 = vmatpush1.msra.mxu0 0.0
    %399 = vmatprep.subr.mxu0 0.0
    %400 = vmatpush1.msra.mxu0 0.0
    %401 = vmatprep.subr.mxu0 0.0
    %402 = vmatpush1.msra.mxu0 0.0
    %403 = vmatprep.subr.mxu0 0.0
    %404 = vmatpush1.msra.mxu0 0.0
    %405 = vmatprep.subr.mxu0 0.0
    %406 = vmatpush1.msra.mxu0 0.0
    %407 = vmatprep.subr.mxu0 0.0
    %408 = vmatpush1.msra.mxu0 0.0
    %409 = vmatprep.subr.mxu0 0.0
    %410 = vmatpush1.msra.mxu0 0.0
    %411 = vmatprep.subr.mxu0 0.0
    %412 = vmatpush1.msra.mxu0 0.0
    %413 = vmatprep.subr.mxu0 0.0
    %414 = vmatpush1.msra.mxu0 0.0
    %415 = vmatprep.subr.mxu0 0.0
    %416 = vmatpush1.msra.mxu0 0.0
    %417 = vmatprep.subr.mxu0 0.0
    %418 = vmatpush1.msra.mxu0 0.0
    %419 = vmatprep.subr.mxu0 0.0
    %420 = vmatpush1.msra.mxu0 0.0
    %421 = vmatprep.subr.mxu0 0.0
    %422 = vmatpush1.msra.mxu0 0.0
    %423 = vmatprep.subr.mxu0 0.0
    %424 = vmatpush1.msra.mxu0 0.0
    %425 = vmatprep.subr.mxu0 0.0
    %426 = vmatpush1.msra.mxu0 0.0
    %427 = vmatprep.subr.mxu0 0.0
    %428 = vmatpush1.msra.mxu0 0.0
    %429 = vmatprep.subr.mxu0 0.0
    %430 = vmatpush1.msra.mxu0 0.0
    %431 = vmatprep.subr.mxu0 0.0
    %432 = vmatpush1.msra.mxu0 0.0
    %433 = vmatprep.subr.mxu0 0.0
    %434 = vmatpush1.msra.mxu0 0.0
    %435 = vmatprep.subr.mxu0 0.0
    %436 = vmatpush1.msra.mxu0 0.0
    %437 = vmatprep.subr.mxu0 0.0
    %438 = vmatpush1.msra.mxu0 0.0
    %439 = vmatprep.subr.mxu0 0.0
    %440 = vmatpush1.msra.mxu0 0.0
    %441 = vmatprep.subr.mxu0 0.0
    %442 = vmatpush1.msra.mxu0 0.0
    %443 = vmatprep.subr.mxu0 0.0
    %444 = vmatpush1.msra.mxu0 0.0
    %445 = vmatprep.mubr.f32.mxu0 0.0
    %446 = vmatmul.mubr.f32.gmra.mrb[0].mxu0 %v379
    %v447 = vpop.f32.mrb[0].mxu0
    %v448 = vadd.f32 0.0, %v447
    %v449 = vpop.f32.mrb[0].mxu0
    %450 = vdwg.mxu0
    %v452 = vrot.slane %v448, 4
    %v454 = vadd.f32 %v124, %v452
    %v455 = vxor.u32 %v454, 2147483648
    %v456 = vmul.f32 %v455, 1.442695
    %v457 = vpow.pop %v456
    %v458 = vadd.f32 %v457, 1.0
    %v459 = vrcp.pop %v458
    %v460 = vmul.f32 1.0, %v459
    %v461 = vtanh.pop %v454
    %v463 = vrot.slane %v359, 6
    %v465 = vmul.f32 %v460, %v463
    %467 = vrot.lane.b32.xlu0 %v461, 64
    %v468 = vpop.permute.xlu0 %467
    %v470 = vmul.f32 %v460, %v468
    %472 = vrot.lane.b32.xlu0 %v470, 32
    %v473 = vpop.permute.xlu0 %472
    %v475 = vadd.f32 %v465, %v473
    %v476 = vtanh.pop %v475
    %478 = vrot.lane.b32.xlu0 %v476, 64
    %v479 = vpop.permute.xlu0 %478
    %v481 = vmul.f32 %v460, %v479
    %v482 = vmul.f32 %v481, %v249
    %484 = vrot.lane.b32.xlu0 %v482, 32
    %v485 = vpop.permute.xlu0 %484
    %vm487 = vcmask 259076
    %v488 = vsel %vm487, %v485, 0.0
    %489 = vadd.xlane.f32.xlu0 %v488
    %v490 = vpop.xlane.xlu0 %489
    %v492 = vrot.slane %v481, 4
    %493 = vrot.lane.b32.xlu0 %v492, 32
    %v494 = vpop.permute.xlu0 %493
    %v495 = vsel %vm140, %v494, 0
    %497 = vmatprep.subr.mxu0 0.0
    %498 = vmatpush1.msra.mxu0 %v132
    %499 = vmatprep.subr.mxu0 0.0
    %500 = vmatpush1.msra.mxu0 %v133
    %501 = vmatprep.subr.mxu0 0.0
    %502 = vmatpush1.msra.mxu0 %v134
    %503 = vmatprep.subr.mxu0 0.0
    %504 = vmatpush1.msra.mxu0 %v135
    %505 = vmatprep.subr.mxu0 0.0
    %506 = vmatpush1.msra.mxu0 0.0
    %507 = vmatprep.subr.mxu0 0.0
    %508 = vmatpush1.msra.mxu0 0.0
    %509 = vmatprep.subr.mxu0 0.0
    %510 = vmatpush1.msra.mxu0 0.0
    %511 = vmatprep.subr.mxu0 0.0
    %512 = vmatpush1.msra.mxu0 0.0
    %513 = vmatprep.subr.mxu0 0.0
    %514 = vmatpush1.msra.mxu0 0.0
    %515 = vmatprep.subr.mxu0 0.0
    %516 = vmatpush1.msra.mxu0 0.0
    %517 = vmatprep.subr.mxu0 0.0
    %518 = vmatpush1.msra.mxu0 0.0
    %519 = vmatprep.subr.mxu0 0.0
    %520 = vmatpush1.msra.mxu0 0.0
    %521 = vmatprep.subr.mxu0 0.0
    %522 = vmatpush1.msra.mxu0 0.0
    %523 = vmatprep.subr.mxu0 0.0
    %524 = vmatpush1.msra.mxu0 0.0
    %525 = vmatprep.subr.mxu0 0.0
    %526 = vmatpush1.msra.mxu0 0.0
    %527 = vmatprep.subr.mxu0 0.0
    %528 = vmatpush1.msra.mxu0 0.0
    %529 = vmatprep.subr.mxu0 0.0
    %530 = vmatpush1.msra.mxu0 0.0
    %531 = vmatprep.subr.mxu0 0.0
    %532 = vmatpush1.msra.mxu0 0.0
    %533 = vmatprep.subr.mxu0 0.0
    %534 = vmatpush1.msra.mxu0 0.0
    %535 = vmatprep.subr.mxu0 0.0
    %536 = vmatpush1.msra.mxu0 0.0
    %537 = vmatprep.subr.mxu0 0.0
    %538 = vmatpush1.msra.mxu0 0.0
    %539 = vmatprep.subr.mxu0 0.0
    %540 = vmatpush1.msra.mxu0 0.0
    %541 = vmatprep.subr.mxu0 0.0
    %542 = vmatpush1.msra.mxu0 0.0
    %543 = vmatprep.subr.mxu0 0.0
    %544 = vmatpush1.msra.mxu0 0.0
    %545 = vmatprep.subr.mxu0 0.0
    %546 = vmatpush1.msra.mxu0 0.0
    %547 = vmatprep.subr.mxu0 0.0
    %548 = vmatpush1.msra.mxu0 0.0
    %549 = vmatprep.subr.mxu0 0.0
    %550 = vmatpush1.msra.mxu0 0.0
    %551 = vmatprep.subr.mxu0 0.0
    %552 = vmatpush1.msra.mxu0 0.0
    %553 = vmatprep.subr.mxu0 0.0
    %554 = vmatpush1.msra.mxu0 0.0
    %555 = vmatprep.subr.mxu0 0.0
    %556 = vmatpush1.msra.mxu0 0.0
    %557 = vmatprep.subr.mxu0 0.0
    %558 = vmatpush1.msra.mxu0 0.0
    %559 = vmatprep.subr.mxu0 0.0
    %560 = vmatpush1.msra.mxu0 0.0
    %561 = vmatprep.mubr.f32.mxu0 0.0
    %562 = vmatmul.mubr.f32.gmra.mrb[0].mxu0 %v495
    %v563 = vpop.f32.mrb[0].mxu0
    %v564 = vadd.f32 0.0, %v563
    %v565 = vpop.f32.mrb[0].mxu0
    %566 = vdwg.mxu0
    %v568 = vrot.slane %v564, 2
    %v570 = vadd.f32 %v124, %v568
    %v571 = vxor.u32 %v570, 2147483648
    %v572 = vmul.f32 %v571, 1.442695
    %v573 = vpow.pop %v572
    %v574 = vadd.f32 %v573, 1.0
    %v575 = vrcp.pop %v574
    %v576 = vmul.f32 1.0, %v575
    %v577 = vtanh.pop %v570
    %v579 = vrot.slane %v475, 6
    %v581 = vmul.f32 %v576, %v579
    %583 = vrot.lane.b32.xlu0 %v577, 64
    %v584 = vpop.permute.xlu0 %583
    %v586 = vmul.f32 %v576, %v584
    %588 = vrot.lane.b32.xlu0 %v586, 32
    %v589 = vpop.permute.xlu0 %588
    %v591 = vadd.f32 %v581, %v589
    %v592 = vtanh.pop %v591
    %594 = vrot.lane.b32.xlu0 %v592, 64
    %v595 = vpop.permute.xlu0 %594
    %v597 = vmul.f32 %v576, %v595
    %v598 = vmul.f32 %v597, %v249
    %600 = vrot.lane.b32.xlu0 %v598, 32
    %v601 = vpop.permute.xlu0 %600
    %vm603 = vcmask 261126
    %v604 = vsel %vm603, %v601, 0.0
    %605 = vadd.xlane.f32.xlu0 %v604
    %v606 = vpop.xlane.xlu0 %605
    %v608 = vrot.slane %v597, 6
    %609 = vrot.lane.b32.xlu0 %v608, 32
    %v610 = vpop.permute.xlu0 %609
    %v611 = vsel %vm140, %v610, 0
    %613 = vmatprep.subr.mxu0 0.0
    %614 = vmatpush1.msra.mxu0 %v132
    %615 = vmatprep.subr.mxu0 0.0
    %616 = vmatpush1.msra.mxu0 %v133
    %617 = vmatprep.subr.mxu0 0.0
    %618 = vmatpush1.msra.mxu0 %v134
    %619 = vmatprep.subr.mxu0 0.0
    %620 = vmatpush1.msra.mxu0 %v135
    %621 = vmatprep.subr.mxu0 0.0
    %622 = vmatpush1.msra.mxu0 0.0
    %623 = vmatprep.subr.mxu0 0.0
    %624 = vmatpush1.msra.mxu0 0.0
    %625 = vmatprep.subr.mxu0 0.0
    %626 = vmatpush1.msra.mxu0 0.0
    %627 = vmatprep.subr.mxu0 0.0
    %628 = vmatpush1.msra.mxu0 0.0
    %629 = vmatprep.subr.mxu0 0.0
    %630 = vmatpush1.msra.mxu0 0.0
    %631 = vmatprep.subr.mxu0 0.0
    %632 = vmatpush1.msra.mxu0 0.0
    %633 = vmatprep.subr.mxu0 0.0
    %634 = vmatpush1.msra.mxu0 0.0
    %635 = vmatprep.subr.mxu0 0.0
    %636 = vmatpush1.msra.mxu0 0.0
    %637 = vmatprep.subr.mxu0 0.0
    %638 = vmatpush1.msra.mxu0 0.0
    %639 = vmatprep.subr.mxu0 0.0
    %640 = vmatpush1.msra.mxu0 0.0
    %641 = vmatprep.subr.mxu0 0.0
    %642 = vmatpush1.msra.mxu0 0.0
    %643 = vmatprep.subr.mxu0 0.0
    %644 = vmatpush1.msra.mxu0 0.0
    %645 = vmatprep.subr.mxu0 0.0
    %646 = vmatpush1.msra.mxu0 0.0
    %647 = vmatprep.subr.mxu0 0.0
    %648 = vmatpush1.msra.mxu0 0.0
    %649 = vmatprep.subr.mxu0 0.0
    %650 = vmatpush1.msra.mxu0 0.0
    %651 = vmatprep.subr.mxu0 0.0
    %652 = vmatpush1.msra.mxu0 0.0
    %653 = vmatprep.subr.mxu0 0.0
    %654 = vmatpush1.msra.mxu0 0.0
    %655 = vmatprep.subr.mxu0 0.0
    %656 = vmatpush1.msra.mxu0 0.0
    %657 = vmatprep.subr.mxu0 0.0
    %658 = vmatpush1.msra.mxu0 0.0
    %659 = vmatprep.subr.mxu0 0.0
    %660 = vmatpush1.msra.mxu0 0.0
    %661 = vmatprep.subr.mxu0 0.0
    %662 = vmatpush1.msra.mxu0 0.0
    %663 = vmatprep.subr.mxu0 0.0
    %664 = vmatpush1.msra.mxu0 0.0
    %665 = vmatprep.subr.mxu0 0.0
    %666 = vmatpush1.msra.mxu0 0.0
    %667 = vmatprep.subr.mxu0 0.0
    %668 = vmatpush1.msra.mxu0 0.0
    %669 = vmatprep.subr.mxu0 0.0
    %670 = vmatpush1.msra.mxu0 0.0
    %671 = vmatprep.subr.mxu0 0.0
    %672 = vmatpush1.msra.mxu0 0.0
    %673 = vmatprep.subr.mxu0 0.0
    %674 = vmatpush1.msra.mxu0 0.0
    %675 = vmatprep.subr.mxu0 0.0
    %676 = vmatpush1.msra.mxu0 0.0
    %677 = vmatprep.mubr.f32.mxu0 0.0
    %678 = vmatmul.mubr.f32.gmra.mrb[0].mxu0 %v611
    %v679 = vpop.f32.mrb[0].mxu0
    %v680 = vadd.f32 0.0, %v679
    %v681 = vpop.f32.mrb[0].mxu0
    %682 = vdwg.mxu0
    %v683 = vadd.f32 %v129, %v680
    %v684 = vxor.u32 %v683, 2147483648
    %v685 = vmul.f32 %v684, 1.442695
    %v686 = vpow.pop %v685
    %v687 = vadd.f32 %v686, 1.0
    %v688 = vrcp.pop %v687
    %v689 = vmul.f32 1.0, %v688
    %v690 = vtanh.pop %v683
    %v692 = vrot.slane %v591, 6
    %v694 = vmul.f32 %v689, %v692
    %696 = vrot.lane.b32.xlu0 %v690, 64
    %v697 = vpop.permute.xlu0 %696
    %v699 = vmul.f32 %v689, %v697
    %701 = vrot.lane.b32.xlu0 %v699, 32
    %v702 = vpop.permute.xlu0 %701
    %v704 = vadd.f32 %v694, %v702
    %v705 = vtanh.pop %v704
    %707 = vrot.lane.b32.xlu0 %v705, 64
    %v708 = vpop.permute.xlu0 %707
    %v710 = vmul.f32 %v689, %v708
    %v711 = vmul.f32 %v710, %v249
    %713 = vrot.lane.b32.xlu0 %v711, 32
    %v714 = vpop.permute.xlu0 %713
    %v716 = vsel %vm256, %v714, 0.0
    %717 = vadd.xlane.f32.xlu0 %v716
    %v718 = vpop.xlane.xlu0 %717
    %720 = vrot.lane.b32.xlu0 %v710, 32
    %v721 = vpop.permute.xlu0 %720
    %v722 = vsel %vm140, %v721, 0
    %724 = vmatprep.subr.mxu0 0.0
    %725 = vmatpush1.msra.mxu0 %v132
    %726 = vmatprep.subr.mxu0 0.0
    %727 = vmatpush1.msra.mxu0 %v133
    %728 = vmatprep.subr.mxu0 0.0
    %729 = vmatpush1.msra.mxu0 %v134
    %730 = vmatprep.subr.mxu0 0.0
    %731 = vmatpush1.msra.mxu0 %v135
    %732 = vmatprep.subr.mxu0 0.0
    %733 = vmatpush1.msra.mxu0 0.0
    %734 = vmatprep.subr.mxu0 0.0
    %735 = vmatpush1.msra.mxu0 0.0
    %736 = vmatprep.subr.mxu0 0.0
    %737 = vmatpush1.msra.mxu0 0.0
    %738 = vmatprep.subr.mxu0 0.0
    %739 = vmatpush1.msra.mxu0 0.0
    %740 = vmatprep.subr.mxu0 0.0
    %741 = vmatpush1.msra.mxu0 0.0
    %742 = vmatprep.subr.mxu0 0.0
    %743 = vmatpush1.msra.mxu0 0.0
    %744 = vmatprep.subr.mxu0 0.0
    %745 = vmatpush1.msra.mxu0 0.0
    %746 = vmatprep.subr.mxu0 0.0
    %747 = vmatpush1.msra.mxu0 0.0
    %748 = vmatprep.subr.mxu0 0.0
    %749 = vmatpush1.msra.mxu0 0.0
    %750 = vmatprep.subr.mxu0 0.0
    %751 = vmatpush1.msra.mxu0 0.0
    %752 = vmatprep.subr.mxu0 0.0
    %753 = vmatpush1.msra.mxu0 0.0
    %754 = vmatprep.subr.mxu0 0.0
    %755 = vmatpush1.msra.mxu0 0.0
    %756 = vmatprep.subr.mxu0 0.0
    %757 = vmatpush1.msra.mxu0 0.0
    %758 = vmatprep.subr.mxu0 0.0
    %759 = vmatpush1.msra.mxu0 0.0
    %760 = vmatprep.subr.mxu0 0.0
    %761 = vmatpush1.msra.mxu0 0.0
    %762 = vmatprep.subr.mxu0 0.0
    %763 = vmatpush1.msra.mxu0 0.0
    %764 = vmatprep.subr.mxu0 0.0
    %765 = vmatpush1.msra.mxu0 0.0
    %766 = vmatprep.subr.mxu0 0.0
    %767 = vmatpush1.msra.mxu0 0.0
    %768 = vmatprep.subr.mxu0 0.0
    %769 = vmatpush1.msra.mxu0 0.0
    %770 = vmatprep.subr.mxu0 0.0
    %771 = vmatpush1.msra.mxu0 0.0
    %772 = vmatprep.subr.mxu0 0.0
    %773 = vmatpush1.msra.mxu0 0.0
    %774 = vmatprep.subr.mxu0 0.0
    %775 = vmatpush1.msra.mxu0 0.0
    %776 = vmatprep.subr.mxu0 0.0
    %777 = vmatpush1.msra.mxu0 0.0
    %778 = vmatprep.subr.mxu0 0.0
    %779 = vmatpush1.msra.mxu0 0.0
    %780 = vmatprep.subr.mxu0 0.0
    %781 = vmatpush1.msra.mxu0 0.0
    %782 = vmatprep.subr.mxu0 0.0
    %783 = vmatpush1.msra.mxu0 0.0
    %784 = vmatprep.subr.mxu0 0.0
    %785 = vmatpush1.msra.mxu0 0.0
    %786 = vmatprep.subr.mxu0 0.0
    %787 = vmatpush1.msra.mxu0 0.0
    %788 = vmatprep.mubr.f32.mxu0 0.0
    %789 = vmatmul.mubr.f32.gmra.mrb[0].mxu0 %v722
    %v790 = vpop.f32.mrb[0].mxu0
    %v791 = vadd.f32 0.0, %v790
    %v792 = vpop.f32.mrb[0].mxu0
    %793 = vdwg.mxu0
    %v795 = vrot.slane %v791, 6
    %v797 = vadd.f32 %v129, %v795
    %v798 = vxor.u32 %v797, 2147483648
    %v799 = vmul.f32 %v798, 1.442695
    %v800 = vpow.pop %v799
    %v801 = vadd.f32 %v800, 1.0
    %v802 = vrcp.pop %v801
    %v803 = vmul.f32 1.0, %v802
    %v804 = vtanh.pop %v797
    %v806 = vrot.slane %v704, 6
    %v808 = vmul.f32 %v803, %v806
    %810 = vrot.lane.b32.xlu0 %v804, 64
    %v811 = vpop.permute.xlu0 %810
    %v813 = vmul.f32 %v803, %v811
    %815 = vrot.lane.b32.xlu0 %v813, 32
    %v816 = vpop.permute.xlu0 %815
    %v818 = vadd.f32 %v808, %v816
    %v819 = vtanh.pop %v818
    %821 = vrot.lane.b32.xlu0 %v819, 64
    %v822 = vpop.permute.xlu0 %821
    %v824 = vmul.f32 %v803, %v822
    %v825 = vmul.f32 %v824, %v249
    %827 = vrot.lane.b32.xlu0 %v825, 32
    %v828 = vpop.permute.xlu0 %827
    %v830 = vsel %vm371, %v828, 0.0
    %831 = vadd.xlane.f32.xlu0 %v830
    %v832 = vpop.xlane.xlu0 %831
    %v834 = vrot.slane %v824, 2
    %835 = vrot.lane.b32.xlu0 %v834, 32
    %v836 = vpop.permute.xlu0 %835
    %v837 = vsel %vm140, %v836, 0
    %839 = vmatprep.subr.mxu0 0.0
    %840 = vmatpush1.msra.mxu0 %v132
    %841 = vmatprep.subr.mxu0 0.0
    %842 = vmatpush1.msra.mxu0 %v133
    %843 = vmatprep.subr.mxu0 0.0
    %844 = vmatpush1.msra.mxu0 %v134
    %845 = vmatprep.subr.mxu0 0.0
    %846 = vmatpush1.msra.mxu0 %v135
    %847 = vmatprep.subr.mxu0 0.0
    %848 = vmatpush1.msra.mxu0 0.0
    %849 = vmatprep.subr.mxu0 0.0
    %850 = vmatpush1.msra.mxu0 0.0
    %851 = vmatprep.subr.mxu0 0.0
    %852 = vmatpush1.msra.mxu0 0.0
    %853 = vmatprep.subr.mxu0 0.0
    %854 = vmatpush1.msra.mxu0 0.0
    %855 = vmatprep.subr.mxu0 0.0
    %856 = vmatpush1.msra.mxu0 0.0
    %857 = vmatprep.subr.mxu0 0.0
    %858 = vmatpush1.msra.mxu0 0.0
    %859 = vmatprep.subr.mxu0 0.0
    %860 = vmatpush1.msra.mxu0 0.0
    %861 = vmatprep.subr.mxu0 0.0
    %862 = vmatpush1.msra.mxu0 0.0
    %863 = vmatprep.subr.mxu0 0.0
    %864 = vmatpush1.msra.mxu0 0.0
    %865 = vmatprep.subr.mxu0 0.0
    %866 = vmatpush1.msra.mxu0 0.0
    %867 = vmatprep.subr.mxu0 0.0
    %868 = vmatpush1.msra.mxu0 0.0
    %869 = vmatprep.subr.mxu0 0.0
    %870 = vmatpush1.msra.mxu0 0.0
    %871 = vmatprep.subr.mxu0 0.0
    %872 = vmatpush1.msra.mxu0 0.0
    %873 = vmatprep.subr.mxu0 0.0
    %874 = vmatpush1.msra.mxu0 0.0
    %875 = vmatprep.subr.mxu0 0.0
    %876 = vmatpush1.msra.mxu0 0.0
    %877 = vmatprep.subr.mxu0 0.0
    %878 = vmatpush1.msra.mxu0 0.0
    %879 = vmatprep.subr.mxu0 0.0
    %880 = vmatpush1.msra.mxu0 0.0
    %881 = vmatprep.subr.mxu0 0.0
    %882 = vmatpush1.msra.mxu0 0.0
    %883 = vmatprep.subr.mxu0 0.0
    %884 = vmatpush1.msra.mxu0 0.0
    %885 = vmatprep.subr.mxu0 0.0
    %886 = vmatpush1.msra.mxu0 0.0
    %887 = vmatprep.subr.mxu0 0.0
    %888 = vmatpush1.msra.mxu0 0.0
    %889 = vmatprep.subr.mxu0 0.0
    %890 = vmatpush1.msra.mxu0 0.0
    %891 = vmatprep.subr.mxu0 0.0
    %892 = vmatpush1.msra.mxu0 0.0
    %893 = vmatprep.subr.mxu0 0.0
    %894 = vmatpush1.msra.mxu0 0.0
    %895 = vmatprep.subr.mxu0 0.0
    %896 = vmatpush1.msra.mxu0 0.0
    %897 = vmatprep.subr.mxu0 0.0
    %898 = vmatpush1.msra.mxu0 0.0
    %899 = vmatprep.subr.mxu0 0.0
    %900 = vmatpush1.msra.mxu0 0.0
    %901 = vmatprep.subr.mxu0 0.0
    %902 = vmatpush1.msra.mxu0 0.0
    %903 = vmatprep.mubr.f32.mxu0 0.0
    %904 = vmatmul.mubr.f32.gmra.mrb[0].mxu0 %v837
    %v905 = vpop.f32.mrb[0].mxu0
    %v906 = vadd.f32 0.0, %v905
    %v907 = vpop.f32.mrb[0].mxu0
    %908 = vdwg.mxu0
    %v910 = vrot.slane %v906, 4
    %v912 = vadd.f32 %v129, %v910
    %v913 = vxor.u32 %v912, 2147483648
    %v914 = vmul.f32 %v913, 1.442695
    %v915 = vpow.pop %v914
    %v916 = vadd.f32 %v915, 1.0
    %v917 = vrcp.pop %v916
    %v918 = vmul.f32 1.0, %v917
    %v919 = vtanh.pop %v912
    %v921 = vrot.slane %v818, 6
    %v923 = vmul.f32 %v918, %v921
    %925 = vrot.lane.b32.xlu0 %v919, 64
    %v926 = vpop.permute.xlu0 %925
    %v928 = vmul.f32 %v918, %v926
    %930 = vrot.lane.b32.xlu0 %v928, 32
    %v931 = vpop.permute.xlu0 %930
    %v933 = vadd.f32 %v923, %v931
    %v934 = vtanh.pop %v933
    %936 = vrot.lane.b32.xlu0 %v934, 64
    %v937 = vpop.permute.xlu0 %936
    %v939 = vmul.f32 %v918, %v937
    %v940 = vmul.f32 %v939, %v249
    %942 = vrot.lane.b32.xlu0 %v940, 32
    %v943 = vpop.permute.xlu0 %942
    %v945 = vsel %vm487, %v943, 0.0
    %946 = vadd.xlane.f32.xlu0 %v945
    %v947 = vpop.xlane.xlu0 %946
    %v949 = vrot.slane %v939, 4
    %950 = vrot.lane.b32.xlu0 %v949, 32
    %v951 = vpop.permute.xlu0 %950
    %v952 = vsel %vm140, %v951, 0
    %954 = vmatprep.subr.mxu0 0.0
    %955 = vmatpush1.msra.mxu0 %v132
    %956 = vmatprep.subr.mxu0 0.0
    %957 = vmatpush1.msra.mxu0 %v133
    %958 = vmatprep.subr.mxu0 0.0
    %959 = vmatpush1.msra.mxu0 %v134
    %960 = vmatprep.subr.mxu0 0.0
    %961 = vmatpush1.msra.mxu0 %v135
    %962 = vmatprep.subr.mxu0 0.0
    %963 = vmatpush1.msra.mxu0 0.0
    %964 = vmatprep.subr.mxu0 0.0
    %965 = vmatpush1.msra.mxu0 0.0
    %966 = vmatprep.subr.mxu0 0.0
    %967 = vmatpush1.msra.mxu0 0.0
    %968 = vmatprep.subr.mxu0 0.0
    %969 = vmatpush1.msra.mxu0 0.0
    %970 = vmatprep.subr.mxu0 0.0
    %971 = vmatpush1.msra.mxu0 0.0
    %972 = vmatprep.subr.mxu0 0.0
    %973 = vmatpush1.msra.mxu0 0.0
    %974 = vmatprep.subr.mxu0 0.0
    %975 = vmatpush1.msra.mxu0 0.0
    %976 = vmatprep.subr.mxu0 0.0
    %977 = vmatpush1.msra.mxu0 0.0
    %978 = vmatprep.subr.mxu0 0.0
    %979 = vmatpush1.msra.mxu0 0.0
    %980 = vmatprep.subr.mxu0 0.0
    %981 = vmatpush1.msra.mxu0 0.0
    %982 = vmatprep.subr.mxu0 0.0
    %983 = vmatpush1.msra.mxu0 0.0
    %984 = vmatprep.subr.mxu0 0.0
    %985 = vmatpush1.msra.mxu0 0.0
    %986 = vmatprep.subr.mxu0 0.0
    %987 = vmatpush1.msra.mxu0 0.0
    %988 = vmatprep.subr.mxu0 0.0
    %989 = vmatpush1.msra.mxu0 0.0
    %990 = vmatprep.subr.mxu0 0.0
    %991 = vmatpush1.msra.mxu0 0.0
    %992 = vmatprep.subr.mxu0 0.0
    %993 = vmatpush1.msra.mxu0 0.0
    %994 = vmatprep.subr.mxu0 0.0
    %995 = vmatpush1.msra.mxu0 0.0
    %996 = vmatprep.subr.mxu0 0.0
    %997 = vmatpush1.msra.mxu0 0.0
    %998 = vmatprep.subr.mxu0 0.0
    %999 = vmatpush1.msra.mxu0 0.0
    %1000 = vmatprep.subr.mxu0 0.0
    %1001 = vmatpush1.msra.mxu0 0.0
    %1002 = vmatprep.subr.mxu0 0.0
    %1003 = vmatpush1.msra.mxu0 0.0
    %1004 = vmatprep.subr.mxu0 0.0
    %1005 = vmatpush1.msra.mxu0 0.0
    %1006 = vmatprep.subr.mxu0 0.0
    %1007 = vmatpush1.msra.mxu0 0.0
    %1008 = vmatprep.subr.mxu0 0.0
    %1009 = vmatpush1.msra.mxu0 0.0
    %1010 = vmatprep.subr.mxu0 0.0
    %1011 = vmatpush1.msra.mxu0 0.0
    %1012 = vmatprep.subr.mxu0 0.0
    %1013 = vmatpush1.msra.mxu0 0.0
    %1014 = vmatprep.subr.mxu0 0.0
    %1015 = vmatpush1.msra.mxu0 0.0
    %1016 = vmatprep.subr.mxu0 0.0
    %1017 = vmatpush1.msra.mxu0 0.0
    %1018 = vmatprep.mubr.f32.mxu0 0.0
    %1019 = vmatmul.mubr.f32.gmra.mrb[0].mxu0 %v952
    %v1020 = vpop.f32.mrb[0].mxu0
    %v1021 = vadd.f32 0.0, %v1020
    %v1022 = vpop.f32.mrb[0].mxu0
    %1023 = vdwg.mxu0
    %v1025 = vrot.slane %v1021, 2
    %v1027 = vadd.f32 %v129, %v1025
    %v1028 = vxor.u32 %v1027, 2147483648
    %v1029 = vmul.f32 %v1028, 1.442695
    %v1030 = vpow.pop %v1029
    %v1031 = vadd.f32 %v1030, 1.0
    %v1032 = vrcp.pop %v1031
    %v1033 = vmul.f32 1.0, %v1032
    %v1034 = vtanh.pop %v1027
    %v1036 = vrot.slane %v933, 6
    %v1038 = vmul.f32 %v1033, %v1036
    %1040 = vrot.lane.b32.xlu0 %v1034, 64
    %v1041 = vpop.permute.xlu0 %1040
    %v1043 = vmul.f32 %v1033, %v1041
    %1045 = vrot.lane.b32.xlu0 %v1043, 32
    %v1046 = vpop.permute.xlu0 %1045
    %v1048 = vadd.f32 %v1038, %v1046
    %v1049 = vtanh.pop %v1048
    %1051 = vrot.lane.b32.xlu0 %v1049, 64
    %v1052 = vpop.permute.xlu0 %1051
    %v1054 = vmul.f32 %v1033, %v1052
    %v1055 = vmul.f32 %v1054, %v249
    %1057 = vrot.lane.b32.xlu0 %v1055, 32
    %v1058 = vpop.permute.xlu0 %1057
    %v1060 = vsel %vm603, %v1058, 0.0
    %1061 = vadd.xlane.f32.xlu0 %v1060
    %v1062 = vpop.xlane.xlu0 %1061
    %v1064 = vrot.slane %v374, 2
    %v1067 = vrot.slane %v490, 4
    %v1070 = vrot.slane %v606, 6
    %v1073 = vrot.slane %v832, 2
    %v1076 = vrot.slane %v947, 4
    %v1079 = vrot.slane %v1062, 6
    %vm1081 = vcmask 7168
    %v1082 = vsel %vm1081, %v259, %v1064
    %vm1083 = vcmask 15360
    %v1084 = vsel %vm1083, %v1082, %v1067
    %vm1085 = vcmask 23552
    %v1086 = vsel %vm1085, %v1084, %v1070
    %v1087 = vsel %vm46, %v1086, %v718
    %vm1088 = vcmask 39936
    %v1089 = vsel %vm1088, %v1087, %v1073
    %vm1090 = vcmask 48128
    %v1091 = vsel %vm1090, %v1089, %v1076
    %vm1092 = vcmask 56320
    %v1093 = vsel %vm1092, %v1091, %v1079
    %v1095 = vlaneseq
    %v1096 = vshrl.u32 %v1095, 7
    %v1097 = vsub.s32 0, %v1096
    %v1098 = vrot.slane %v137, %v1097
    %1099 = vset.pattern.permute.xlu0 0
    %1100 = vperm.xlu0 %1099, %v1098
    %v1101 = vpop.permute.xlu0 %1100
    %v1103 = vadd.f32 %v1093, %v1101
    %vm1104 = vcmask 58368
    %1105 = vst.msk [vmem:[#allocation3] sm:$0x3] %vm1104, %v1103
    %1107 = vrot.lane.b32.xlu0 %v1054, 32
    %v1108 = vpop.permute.xlu0 %1107
    %1110 = vst.msk [vmem:[#allocation5 - $0x6] sm:$0xc0] %vm603, %v1108
    %1112 = vrot.lane.b32.xlu0 %v1048, 96
    %v1113 = vpop.permute.xlu0 %1112
    %1115 = vst.msk [vmem:[#allocation7 - $0x6] sm:$0xc0] %vm603, %v1113
    // Predicated region
    $region34: #{decoder_forward.1} parent=1 // pred_check
      _
    $region35: #{decoder_forward.1} parent=1 // pred_check_branch
      %1117 = sbr.rel (0) target = $region37
    $region36: #{decoder_forward.1} parent=1 // pred_region
      %s1119 = ssub.s32 32, 32
      %1120 = vsyncadd [#allocation4], %s1119
      %s1122 = sshll.u32 [#allocation3], 4
      %s1123 = int_to_ptr.vmem [resolvable:$true] %s1122
      %1125 = dma.vmem_to_hbm [thread:$0]  %s1123, 32, %s8, [#allocation4]
    $region37: #{decoder_forward.1} parent=1 // pred_fallthru
      _
    // Predicated region
    $region38: #{decoder_forward.1} parent=1 // pred_check
      _
    $region39: #{decoder_forward.1} parent=1 // pred_check_branch
      %1127 = sbr.rel (0) target = $region41
    $region40: #{decoder_forward.1} parent=1 // pred_region
      %s1129 = ssub.s32 32, 32
      %1130 = vsyncadd [#allocation6], %s1129
      %s1132 = sshll.u32 [#allocation5], 4
      %s1133 = int_to_ptr.vmem [resolvable:$true] %s1132
      %1135 = dma.vmem_to_hbm [thread:$0]  %s1133, 32, %s9, [#allocation6]
    $region41: #{decoder_forward.1} parent=1 // pred_fallthru
      _
    // Predicated region
    $region42: #{decoder_forward.1} parent=1 // pred_check
      _
    $region43: #{decoder_forward.1} parent=1 // pred_check_branch
      %1137 = sbr.rel (0) target = $region45
    $region44: #{decoder_forward.1} parent=1 // pred_region
      %s1139 = ssub.s32 32, 32
      %1140 = vsyncadd [#allocation6], %s1139
      %s1142 = sshll.u32 [#allocation7], 4
      %s1143 = int_to_ptr.vmem [resolvable:$true] %s1142
      %1145 = dma.vmem_to_hbm [thread:$0]  %s1143, 32, %s10, [#allocation6]
    $region45: #{decoder_forward.1} parent=1 // pred_fallthru
      _
    // Predicated region
    $region46: #{decoder_forward.1} parent=1 // pred_check
      _
    $region47: #{decoder_forward.1} parent=1 // pred_check_branch
      %1147 = sbr.rel (0) target = $region49
    $region48: #{decoder_forward.1} parent=1 // pred_region
      %1148 = dma.done [#allocation4], 32
    $region49: #{decoder_forward.1} parent=1 // pred_fallthru
      _
    // Predicated region
    $region50: #{decoder_forward.1} parent=1 // pred_check
      _
    $region51: #{decoder_forward.1} parent=1 // pred_check_branch
      %1150 = sbr.rel (0) target = $region53
    $region52: #{decoder_forward.1} parent=1 // pred_region
      %1151 = dma.done [#allocation6], 32
    $region53: #{decoder_forward.1} parent=1 // pred_fallthru
      _
    // Predicated region
    $region54: #{decoder_forward.1} parent=1 // pred_check
      _
    $region55: #{decoder_forward.1} parent=1 // pred_check_branch
      %1153 = sbr.rel (0) target = $region57
    $region56: #{decoder_forward.1} parent=1 // pred_region
      %1154 = dma.done [#allocation6], 32
    $region57: #{decoder_forward.1} parent=1 // pred_fallthru
      _
    %1155 = vsyncpa [#allocation4], 1
    %1156 = vsyncpa [#allocation6], 1

</llo_original>
